<compile_context>
chip_gen: v6e
topology: v6e:2x2x1
jax: 0.10.0
libtpu: 0.0.40
codegen_flags: <defaults>
</compile_context>

<pallas_src>
import functools

import numpy as np
import jax
import jax.numpy as jnp
from jax.experimental import pallas as pl
from jax.experimental.pallas import tpu as pltpu

BN_EPS = 1e-5


@functools.lru_cache(maxsize=1)
def _vmem_limit_bytes():
    # Per-generation budget: ~3/4 of physical VMEM, capped; safe fallback 64 MiB.
    try:
        cap = int(pltpu.get_tpu_info().vmem_capacity_bytes)
        return int(min(0.75 * cap, 96 * 1024 * 1024))
    except Exception:
        return 64 * 1024 * 1024


def _pick_tile(L):
    # L is a multiple of 128 here (wrappers pad); widest lane tile dividing L.
    for t in (2048, 1024, 512, 256, 128):
        if L % t == 0:
            return t
    return L


def _pad_lanes(x, mult=128):
    # Zero-pad the last (lane) axis up to a multiple of `mult`.
    L = x.shape[-1]
    Lp = ((L + mult - 1) // mult) * mult
    if Lp == L:
        return x, L
    return jnp.pad(x, ((0, 0), (0, Lp - L))), L


# ----------------------------- Pallas kernels -----------------------------

def _matmul_stats_kernel(m_ref, x_ref, y_ref, ssum_ref, ssq_ref):
    # Pre-BN activation y = M @ x (computed ONCE), plus per-row sum / sum-of-
    # squares accumulated into small resident outputs (constant block index ->
    # written back once at the end of the grid).  Zero-padded lane columns and
    # zero-padded frequency rows of M contribute exactly 0 to the stats.
    v = jnp.dot(m_ref[...], x_ref[...], preferred_element_type=jnp.float32)
    y_ref[...] = v.astype(y_ref.dtype)

    @pl.when(pl.program_id(0) == 0)
    def _():
        ssum_ref[...] = jnp.zeros_like(ssum_ref)
        ssq_ref[...] = jnp.zeros_like(ssq_ref)

    ssum_ref[...] += jnp.sum(v, axis=1, keepdims=True)
    ssq_ref[...] += jnp.sum(v * v, axis=1, keepdims=True)


def _bn_relu_kernel(y_ref, sc_ref, sh_ref, o_ref):
    # Apply BN scale/shift + ReLU (per-row affine), fully parallel over tiles.
    y = y_ref[...].astype(jnp.float32)
    o_ref[...] = jnp.maximum(y * sc_ref[...] + sh_ref[...], 0.0).astype(o_ref.dtype)


def _bn_relu_dot_kernel(m2_ref, y_ref, sc_ref, sh_ref, o_ref):
    # Apply BN scale/shift + ReLU, then irfft as a dense matmul (m2).
    y = y_ref[...].astype(jnp.float32)
    a = jnp.maximum(y * sc_ref[...] + sh_ref[...], 0.0).astype(jnp.bfloat16)
    o_ref[...] = jnp.dot(m2_ref[...], a,
                         preferred_element_type=jnp.float32).astype(o_ref.dtype)


def _add3_conv_kernel(w_ref, a_ref, b_ref, c_ref, o_ref):
    # conv2( x + fu_output + lfu_output ): fused elementwise add + 1x1 conv.
    s = a_ref[...] + b_ref[...] + c_ref[...]
    o_ref[...] = jnp.dot(w_ref[...], s,
                         preferred_element_type=jnp.float32).astype(o_ref.dtype)


# ----------------------------- Pallas wrappers -----------------------------

def matmul_stats(m, x):
    # m: (R, K) bf16, x: (K, Lp) bf16 with Lp % 128 == 0.
    # Returns y (R, Lp) bf16 pre-BN activation, ssum (R,1) f32, ssq (R,1) f32.
    R, K = m.shape
    Lp = x.shape[1]
    tl = _pick_tile(Lp)
    nt = Lp // tl
    return pl.pallas_call(
        _matmul_stats_kernel,
        out_shape=(jax.ShapeDtypeStruct((R, Lp), jnp.bfloat16),
                   jax.ShapeDtypeStruct((R, 1), jnp.float32),
                   jax.ShapeDtypeStruct((R, 1), jnp.float32)),
        grid=(nt,),
        in_specs=[
            pl.BlockSpec((R, K), lambda j: (0, 0)),
            pl.BlockSpec((K, tl), lambda j: (0, j)),
        ],
        out_specs=(
            pl.BlockSpec((R, tl), lambda j: (0, j)),
            pl.BlockSpec((R, 1), lambda j: (0, 0)),
            pl.BlockSpec((R, 1), lambda j: (0, 0)),
        ),
        compiler_params=pltpu.CompilerParams(
            dimension_semantics=("arbitrary",),
            vmem_limit_bytes=_vmem_limit_bytes()),
    )(m, x)


def bn_relu_apply(y, scale_rows, shift_rows):
    R, Lp = y.shape
    tl = _pick_tile(Lp)
    return pl.pallas_call(
        _bn_relu_kernel,
        out_shape=jax.ShapeDtypeStruct((R, Lp), jnp.bfloat16),
        grid=(Lp // tl,),
        in_specs=[
            pl.BlockSpec((R, tl), lambda j: (0, j)),
            pl.BlockSpec((R, 1), lambda j: (0, 0)),
            pl.BlockSpec((R, 1), lambda j: (0, 0)),
        ],
        out_specs=pl.BlockSpec((R, tl), lambda j: (0, j)),
        compiler_params=pltpu.CompilerParams(
            dimension_semantics=("parallel",),
            vmem_limit_bytes=_vmem_limit_bytes()),
    )(y, scale_rows, shift_rows)


def bn_relu_irfft(m2, y, scale_rows, shift_rows):
    R, Lp = y.shape
    Ro = m2.shape[0]
    tl = _pick_tile(Lp)
    return pl.pallas_call(
        _bn_relu_dot_kernel,
        out_shape=jax.ShapeDtypeStruct((Ro, Lp), jnp.bfloat16),
        grid=(Lp // tl,),
        in_specs=[
            pl.BlockSpec((Ro, R), lambda j: (0, 0)),
            pl.BlockSpec((R, tl), lambda j: (0, j)),
            pl.BlockSpec((R, 1), lambda j: (0, 0)),
            pl.BlockSpec((R, 1), lambda j: (0, 0)),
        ],
        out_specs=pl.BlockSpec((Ro, tl), lambda j: (0, j)),
        compiler_params=pltpu.CompilerParams(
            dimension_semantics=("parallel",),
            vmem_limit_bytes=_vmem_limit_bytes()),
    )(m2, y, scale_rows, shift_rows)


def add3_conv(w, a, b, c):
    ci, L = a.shape
    co = w.shape[0]
    ap, L_real = _pad_lanes(a)
    bp, _ = _pad_lanes(b)
    cp_, _ = _pad_lanes(c)
    Lp = ap.shape[1]
    tl = _pick_tile(Lp)
    out = pl.pallas_call(
        _add3_conv_kernel,
        out_shape=jax.ShapeDtypeStruct((co, Lp), jnp.bfloat16),
        grid=(Lp // tl,),
        in_specs=[
            pl.BlockSpec((co, ci), lambda j: (0, 0)),
            pl.BlockSpec((ci, tl), lambda j: (0, j)),
            pl.BlockSpec((ci, tl), lambda j: (0, j)),
            pl.BlockSpec((ci, tl), lambda j: (0, j)),
        ],
        out_specs=pl.BlockSpec((co, tl), lambda j: (0, j)),
        compiler_params=pltpu.CompilerParams(
            dimension_semantics=("parallel",),
            vmem_limit_bytes=_vmem_limit_bytes()),
    )(w, ap, bp, cp_)
    return out[:, :L_real] if Lp != L_real else out


# ----------------------------- BN finalize (tiny XLA) -----------------------------

def _bn_scale_shift(ssum, ssq, gamma, beta, count):
    mean = ssum / count
    var = ssq / count - mean * mean          # biased variance (BN training mode)
    scale = gamma * jax.lax.rsqrt(var + BN_EPS)
    shift = beta - mean * scale
    return scale, shift


def conv_bn_relu(x2, w, gamma, beta):
    # 1x1 conv + BatchNorm2d(train) + ReLU.  x2: (Cin, L) bf16 -> (Co, L) bf16.
    xp, L_real = _pad_lanes(x2)
    y, ssum, ssq = matmul_stats(w.astype(jnp.bfloat16), xp)
    scale, shift = _bn_scale_shift(ssum, ssq, gamma, beta, float(L_real))
    h = bn_relu_apply(y, scale, shift)
    return h[:, :L_real] if h.shape[1] != L_real else h


# ----------------------------- FourierUnit -----------------------------

def _dft_mats(F, out_len):
    # rfft / irfft with norm='ortho' as real matrices; out_len may be a multiple
    # of F (periodic rows fold the LFU H-repeat into the inverse transform).
    fr = F // 2 + 1
    s = 1.0 / np.sqrt(F)
    k = np.arange(fr, dtype=np.float64)[:, None]
    f = np.arange(F, dtype=np.float64)[None, :]
    ang = 2.0 * np.pi * k * f / F
    dr = np.cos(ang) * s                       # rfft real part   (fr, F)
    di = -np.sin(ang) * s                      # rfft imag part
    t = np.arange(out_len, dtype=np.float64)[:, None]
    kk = np.arange(fr, dtype=np.float64)[None, :]
    ang2 = 2.0 * np.pi * t * kk / F
    wgt = np.full((fr,), 2.0)
    wgt[0] = 1.0
    if F % 2 == 0:
        wgt[-1] = 1.0                          # DC / Nyquist counted once, imag ignored
    irr = np.cos(ang2) * wgt[None, :] * s      # (out_len, fr)
    iri = -np.sin(ang2) * wgt[None, :] * s
    return (dr.astype(np.float32), di.astype(np.float32),
            irr.astype(np.float32), iri.astype(np.float32))


def fourier_unit(x2, w, gamma, beta, C, F, out_len):
    # x2: (C*F, NW) bf16, rows channel-major then frequency. Returns
    # (Co*out_len, NW) bf16, rows channel-major then spatial.
    co2, c2 = w.shape
    co = co2 // 2
    fr = F // 2 + 1
    frp = ((fr + 7) // 8) * 8                                   # pad Fr to multiple of 8

    dr, di, irr, iri = _dft_mats(F, out_len)
    drp = np.zeros((frp, F), np.float32); drp[:fr] = dr
    dip = np.zeros((frp, F), np.float32); dip[:fr] = di
    irrp = np.zeros((out_len, frp), np.float32); irrp[:, :fr] = irr
    irip = np.zeros((out_len, frp), np.float32); irip[:, :fr] = iri
    eye_o = np.eye(co, dtype=np.float32)
    # inverse transform matrix (compile-time constant): [real block | imag block]
    m2 = jnp.asarray(
        np.concatenate([np.kron(eye_o, irrp), np.kron(eye_o, irip)], axis=1),
        jnp.bfloat16)                                           # (co*out_len, co2*frp)

    # de-interleave conv weight / BN params: [all real | all imag] channel blocks
    rp = np.concatenate([np.arange(0, co2, 2), np.arange(1, co2, 2)])
    cp = np.concatenate([np.arange(0, c2, 2), np.arange(1, c2, 2)])
    w_blk = w[rp][:, cp].astype(jnp.float32)
    g_blk = gamma[rp].astype(jnp.float32)
    b_blk = beta[rp].astype(jnp.float32)
    w_re, w_im = w_blk[:, :C], w_blk[:, C:]
    # Fused rfft + 1x1-conv matrix, built directly (no kron blow-up):
    #   m1[o*frp+k, c*F+f] = w_re[o,c]*drp[k,f] + w_im[o,c]*dip[k,f]
    m1 = (jnp.einsum('oc,kf->okcf', w_re, jnp.asarray(drp)) +
          jnp.einsum('oc,kf->okcf', w_im, jnp.asarray(dip)))
    m1 = m1.reshape(co2 * frp, C * F).astype(jnp.bfloat16)

    xp, NW_real = _pad_lanes(x2)
    # Kernel A: pre-BN spectral activation (once) + per-row stats.
    y, ssum, ssq = matmul_stats(m1, xp)                         # y: (co2*frp, NWp)
    # Fold the frp rows of each BN channel (padded rows are exactly 0).
    s_ch = ssum.reshape(co2, frp).sum(axis=1, keepdims=True)
    q_ch = ssq.reshape(co2, frp).sum(axis=1, keepdims=True)
    scale, shift = _bn_scale_shift(s_ch, q_ch, g_blk, b_blk, float(fr * NW_real))
    scale_rows = jnp.repeat(scale, frp, axis=0)
    shift_rows = jnp.repeat(shift, frp, axis=0)
    # Kernel B: BN apply + ReLU + irfft (padded freq columns of m2 are zero).
    out = bn_relu_irfft(m2, y, scale_rows, shift_rows)
    return out[:, :NW_real] if out.shape[1] != NW_real else out


# ----------------------------- Module forward -----------------------------

@jax.jit
def spectral_transform(x, params):
    # SpectralTransform(stride=1, groups=1, enable_lfu=True) forward (training-mode BN).
    N, Cin, H, W = x.shape
    cmid = params['w1'].shape[0]                 # out_channels // 2
    cout = params['w2'].shape[0]
    L = H * N * W
    NW = N * W

    # downsample = Identity (stride=1).
    # Single boundary layout change: NCHW -> channel-major (C, H, N, W).
    xcm = jnp.transpose(x, (1, 2, 0, 3)).reshape(Cin, L).astype(jnp.bfloat16)

    # conv1: 1x1 conv + BN(train) + ReLU
    h = conv_bn_relu(xcm, params['w1'],
                     params['g1'].astype(jnp.float32),
                     params['b1'].astype(jnp.float32))               # (cmid, L) bf16

    # FourierUnit (fu)
    fu = fourier_unit(h.reshape(cmid * H, NW), params['w_fu'],
                      params['g_fu'], params['b_fu'],
                      C=cmid, F=H, out_len=H)                        # (cmid*H, NW) bf16

    # LFU branch: first cmid//4 channels, H and W each split in two onto channels
    q = cmid // 4
    h4 = h.reshape(cmid, H, N, W)
    xs = h4[:q]
    xs = jnp.concatenate([xs[:, :H // 2], xs[:, H // 2:]], axis=0)
    xs = jnp.concatenate([xs[..., :W // 2], xs[..., W // 2:]], axis=0)   # (cmid, H/2, N, W/2)
    # TODO(synk): feed the LFU input and fold the W-repeat via BlockSpec index_maps
    # instead of these small XLA slice/concat copies.
    lfu = fourier_unit(xs.reshape(cmid * (H // 2), N * (W // 2)),
                       params['w_lfu'], params['g_lfu'], params['b_lfu'],
                       C=cmid, F=H // 2, out_len=H)  # H-repeat folded into irfft matrix
    lfu4 = lfu.reshape(cmid, H, N, W // 2)
    lfu_full = jnp.concatenate([lfu4, lfu4], axis=3).reshape(cmid, L)

    # conv2( h + fu + lfu ): fused add + 1x1 conv (bf16 writeback)
    out = add3_conv(params['w2'].astype(jnp.bfloat16),
                    h, fu.reshape(cmid, L), lfu_full)                # (cout, L) bf16
    return jnp.transpose(out.reshape(cout, H, N, W), (2, 0, 1, 3)).astype(jnp.float32)


# ----------------------------- numpy reference -----------------------------

def _bn_relu_ref(v, gamma, beta):
    mean = v.mean(axis=(0, 2, 3), keepdims=True)
    var = v.var(axis=(0, 2, 3), keepdims=True)       # biased, like BN training
    v = (v - mean) / np.sqrt(var + BN_EPS)
    v = v * gamma.reshape(1, -1, 1, 1) + beta.reshape(1, -1, 1, 1)
    return np.maximum(v, 0.0)


def fourier_unit_ref(x, w, gamma, beta):
    N, C, F, W = x.shape
    sp = np.fft.rfft(x, axis=2, norm='ortho')
    u = np.stack([sp.real, sp.imag], axis=-1)
    u = u.transpose(0, 1, 4, 2, 3).reshape(N, 2 * C, F // 2 + 1, W)
    v = np.einsum('oc,nchw->nohw', w, u)
    v = _bn_relu_ref(v, gamma, beta)
    co = v.shape[1] // 2
    v = v.reshape(N, co, 2, F // 2 + 1, W).transpose(0, 1, 3, 4, 2)
    vc = v[..., 0] + 1j * v[..., 1]
    return np.fft.irfft(vc, n=F, axis=2, norm='ortho')


def spectral_transform_ref(x, params):
    p = {k: np.asarray(v, np.float64) for k, v in params.items()}
    x = np.asarray(x, np.float64)
    h = np.einsum('oc,nchw->nohw', p['w1'], x)
    h = _bn_relu_ref(h, p['g1'].reshape(-1), p['b1'].reshape(-1))
    fu = fourier_unit_ref(h, p['w_fu'], p['g_fu'].reshape(-1), p['b_fu'].reshape(-1))
    c = h.shape[1]
    xs = h[:, :c // 4]
    xs = np.concatenate(np.split(xs, 2, axis=2), axis=1)
    xs = np.concatenate(np.split(xs, 2, axis=3), axis=1)
    xs = fourier_unit_ref(xs, p['w_lfu'], p['g_lfu'].reshape(-1), p['b_lfu'].reshape(-1))
    xs = np.tile(xs, (1, 1, 2, 2))
    return np.einsum('oc,nchw->nohw', p['w2'], h + fu + xs)


# ----------------------------- main -----------------------------

if __name__ == "__main__":
    key = jax.random.PRNGKey(0)
    N, Cin, H, W = 2, 4, 16, 16
    Cout = 8
    ch = Cout // 2                     # out_channels // 2 = 4
    ks = jax.random.split(key, 12)

    x = jax.random.normal(ks[0], (N, Cin, H, W), jnp.float32)

    def w_init(k, co, ci):
        return (jax.random.normal(k, (co, ci), jnp.float32) / np.sqrt(ci)).astype(jnp.float32)

    params = {
        # conv1: Conv2d(Cin, ch, 1, bias=False) + BatchNorm2d(ch)
        'w1': w_init(ks[1], ch, Cin),
        'g1': 1.0 + 0.1 * jax.random.normal(ks[2], (ch, 1), jnp.float32),
        'b1': 0.1 * jax.random.normal(ks[3], (ch, 1), jnp.float32),
        # fu: Conv2d(2*ch, 2*ch, 1, bias=False) + BatchNorm2d(2*ch)
        'w_fu': w_init(ks[4], 2 * ch, 2 * ch),
        'g_fu': 1.0 + 0.1 * jax.random.normal(ks[5], (2 * ch, 1), jnp.float32),
        'b_fu': 0.1 * jax.random.normal(ks[6], (2 * ch, 1), jnp.float32),
        # lfu: same shapes as fu
        'w_lfu': w_init(ks[7], 2 * ch, 2 * ch),
        'g_lfu': 1.0 + 0.1 * jax.random.normal(ks[8], (2 * ch, 1), jnp.float32),
        'b_lfu': 0.1 * jax.random.normal(ks[9], (2 * ch, 1), jnp.float32),
        # conv2: Conv2d(ch, Cout, 1, bias=False)
        'w2': w_init(ks[10], Cout, ch),
    }

    out = jax.block_until_ready(spectral_transform(x, params))
    assert out.shape == (N, Cout, H, W)
    assert bool(jnp.all(jnp.isfinite(out)))

    ref = spectral_transform_ref(np.asarray(x), params)
    # bf16 matmul path with f32 accumulation: loose-but-meaningful tolerance.
    np.testing.assert_allclose(np.asarray(out, np.float64), ref, atol=2e-1, rtol=2e-1)

    print("KERNEL_OK")
</pallas_src>

<mosaic_0001>
module attributes {stable_mosaic.version = 11 : i64} {
  func.func @_matmul_stats_kernel(%arg0: i32, %arg1: memref<4x4xbf16, #tpu.memory_space<vmem>>, %arg2: memref<4x512xbf16, #tpu.memory_space<vmem>>, %arg3: memref<4x512xbf16, #tpu.memory_space<vmem>>, %arg4: memref<4x1xf32, #tpu.memory_space<vmem>>, %arg5: memref<4x1xf32, #tpu.memory_space<vmem>>) attributes {dimension_semantics = [#tpu.dimension_semantics<arbitrary>], iteration_bounds = array<i64: 1>, scalar_prefetch = 0 : i64, scratch_operands = 0 : i64, tpu.core_type = #tpu.core_type<tc>, window_params = [{pipeline_mode = #tpu.pipeline_mode<synchronous>, transform_indices = @transform_0, window_bounds = array<i64: 4, 4>}, {transform_indices = @transform_1, window_bounds = array<i64: 4, 512>}, {transform_indices = @transform_2, window_bounds = array<i64: 4, 512>}, {pipeline_mode = #tpu.pipeline_mode<synchronous>, transform_indices = @transform_3, window_bounds = array<i64: 4, 1>}, {pipeline_mode = #tpu.pipeline_mode<synchronous>, transform_indices = @transform_4, window_bounds = array<i64: 4, 1>}]} {
    %c0 = arith.constant 0 : index
    %c0_0 = arith.constant 0 : index
    %0 = vector.load %arg1[%c0, %c0_0] : memref<4x4xbf16, #tpu.memory_space<vmem>>, vector<4x4xbf16>
    %c0_1 = arith.constant 0 : index
    %c0_2 = arith.constant 0 : index
    %1 = vector.load %arg2[%c0_1, %c0_2] : memref<4x512xbf16, #tpu.memory_space<vmem>>, vector<4x512xbf16>
    %cst = arith.constant dense<0.000000e+00> : vector<4x512xf32>
    %2 = tpu.matmul %0, %1, %cst {dimension_numbers = #tpu.dot_dimension_numbers<[1], [0], [0], [1], [0, 0, 1, 1], [], []>} : vector<4x4xbf16>, vector<4x512xbf16>, vector<4x512xf32> -> vector<4x512xf32>
    %3 = arith.truncf %2 : vector<4x512xf32> to vector<4x512xbf16>
    %c0_3 = arith.constant 0 : index
    %c0_4 = arith.constant 0 : index
    %4 = vector.load %arg3[%c0_3, %c0_4] : memref<4x512xbf16, #tpu.memory_space<vmem>>, vector<4x512xbf16>
    tpu.vector_store %arg3[%c0_3, %c0_4], %3 {strides = array<i32>} : memref<4x512xbf16, #tpu.memory_space<vmem>>, vector<4x512xbf16>,
    %c0_i32 = arith.constant 0 : i32
    %5 = arith.cmpi eq, %arg0, %c0_i32 : i32
    %6 = arith.extui %5 : i1 to i32
    %c0_i32_5 = arith.constant 0 : i32
    %7 = arith.cmpi ne, %6, %c0_i32_5 : i32
    scf.if %7 {
      %cst_16 = arith.constant 0.000000e+00 : f32
      %19 = vector.broadcast %cst_16 : f32 to vector<4x1xf32>
      %c0_17 = arith.constant 0 : index
      %c0_18 = arith.constant 0 : index
      %20 = vector.load %arg4[%c0_17, %c0_18] : memref<4x1xf32, #tpu.memory_space<vmem>>, vector<4x1xf32>
      tpu.vector_store %arg4[%c0_17, %c0_18], %19 {strides = array<i32>} : memref<4x1xf32, #tpu.memory_space<vmem>>, vector<4x1xf32>,
      %cst_19 = arith.constant 0.000000e+00 : f32
      %21 = vector.broadcast %cst_19 : f32 to vector<4x1xf32>
      %c0_20 = arith.constant 0 : index
      %c0_21 = arith.constant 0 : index
      %22 = vector.load %arg5[%c0_20, %c0_21] : memref<4x1xf32, #tpu.memory_space<vmem>>, vector<4x1xf32>
      tpu.vector_store %arg5[%c0_20, %c0_21], %21 {strides = array<i32>} : memref<4x1xf32, #tpu.memory_space<vmem>>, vector<4x1xf32>,
    } else {
    }
    %c0_6 = arith.constant 0 : index
    %c0_7 = arith.constant 0 : index
    %8 = vector.load %arg4[%c0_6, %c0_7] : memref<4x1xf32, #tpu.memory_space<vmem>>, vector<4x1xf32>
    %cst_8 = arith.constant dense<0.000000e+00> : vector<4xf32>
    %9 = vector.multi_reduction <add>, %2, %cst_8 [1] : vector<4x512xf32> to vector<4xf32>
    %10 = vector.shape_cast %9 : vector<4xf32> to vector<4x1xf32>
    %11 = arith.addf %8, %10 : vector<4x1xf32>
    %c0_9 = arith.constant 0 : index
    %c0_10 = arith.constant 0 : index
    %12 = vector.load %arg4[%c0_9, %c0_10] : memref<4x1xf32, #tpu.memory_space<vmem>>, vector<4x1xf32>
    tpu.vector_store %arg4[%c0_9, %c0_10], %11 {strides = array<i32>} : memref<4x1xf32, #tpu.memory_space<vmem>>, vector<4x1xf32>,
    %c0_11 = arith.constant 0 : index
    %c0_12 = arith.constant 0 : index
    %13 = vector.load %arg5[%c0_11, %c0_12] : memref<4x1xf32, #tpu.memory_space<vmem>>, vector<4x1xf32>
    %14 = arith.mulf %2, %2 : vector<4x512xf32>
    %cst_13 = arith.constant dense<0.000000e+00> : vector<4xf32>
    %15 = vector.multi_reduction <add>, %14, %cst_13 [1] : vector<4x512xf32> to vector<4xf32>
    %16 = vector.shape_cast %15 : vector<4xf32> to vector<4x1xf32>
    %17 = arith.addf %13, %16 : vector<4x1xf32>
    %c0_14 = arith.constant 0 : index
    %c0_15 = arith.constant 0 : index
    %18 = vector.load %arg5[%c0_14, %c0_15] : memref<4x1xf32, #tpu.memory_space<vmem>>, vector<4x1xf32>
    tpu.vector_store %arg5[%c0_14, %c0_15], %17 {strides = array<i32>} : memref<4x1xf32, #tpu.memory_space<vmem>>, vector<4x1xf32>,
    return
  }
  func.func @transform_0(%arg0: i32) -> (i32, i32) {
    %c0_i32 = arith.constant 0 : i32
    %c0_i32_0 = arith.constant 0 : i32
    %c0_i32_1 = arith.constant 0 : i32
    return %c0_i32, %c0_i32_0 : i32, i32
  }
  func.func @transform_1(%arg0: i32) -> (i32, i32) {
    %c0_i32 = arith.constant 0 : i32
    %c0_i32_0 = arith.constant 0 : i32
    return %c0_i32, %arg0 : i32, i32
  }
  func.func @transform_2(%arg0: i32) -> (i32, i32) {
    %c0_i32 = arith.constant 0 : i32
    %c0_i32_0 = arith.constant 0 : i32
    return %c0_i32, %arg0 : i32, i32
  }
  func.func @transform_3(%arg0: i32) -> (i32, i32) {
    %c0_i32 = arith.constant 0 : i32
    %c0_i32_0 = arith.constant 0 : i32
    %c0_i32_1 = arith.constant 0 : i32
    return %c0_i32, %c0_i32_0 : i32, i32
  }
  func.func @transform_4(%arg0: i32) -> (i32, i32) {
    %c0_i32 = arith.constant 0 : i32
    %c0_i32_0 = arith.constant 0 : i32
    %c0_i32_1 = arith.constant 0 : i32
    return %c0_i32, %c0_i32_0 : i32, i32
  }
}

module attributes {stable_mosaic.version = 11 : i64} {
  func.func @_bn_relu_kernel(%arg0: i32, %arg1: memref<4x512xbf16, #tpu.memory_space<vmem>>, %arg2: memref<4x1xf32, #tpu.memory_space<vmem>>, %arg3: memref<4x1xf32, #tpu.memory_space<vmem>>, %arg4: memref<4x512xbf16, #tpu.memory_space<vmem>>) attributes {dimension_semantics = [#tpu.dimension_semantics<parallel>], iteration_bounds = array<i64: 1>, scalar_prefetch = 0 : i64, scratch_operands = 0 : i64, tpu.core_type = #tpu.core_type<tc>, window_params = [{transform_indices = @transform_0, window_bounds = array<i64: 4, 512>}, {pipeline_mode = #tpu.pipeline_mode<synchronous>, transform_indices = @transform_1, window_bounds = array<i64: 4, 1>}, {pipeline_mode = #tpu.pipeline_mode<synchronous>, transform_indices = @transform_2, window_bounds = array<i64: 4, 1>}, {transform_indices = @transform_3, window_bounds = array<i64: 4, 512>}]} {
    %c0 = arith.constant 0 : index
    %c0_0 = arith.constant 0 : index
    %0 = vector.load %arg1[%c0, %c0_0] : memref<4x512xbf16, #tpu.memory_space<vmem>>, vector<4x512xbf16>
    %1 = arith.extf %0 : vector<4x512xbf16> to vector<4x512xf32>
    %c0_1 = arith.constant 0 : index
    %c0_2 = arith.constant 0 : index
    %2 = vector.load %arg2[%c0_1, %c0_2] : memref<4x1xf32, #tpu.memory_space<vmem>>, vector<4x1xf32>
    %3 = vector.broadcast %2 : vector<4x1xf32> to vector<4x512xf32>
    %4 = arith.mulf %1, %3 : vector<4x512xf32>
    %c0_3 = arith.constant 0 : index
    %c0_4 = arith.constant 0 : index
    %5 = vector.load %arg3[%c0_3, %c0_4] : memref<4x1xf32, #tpu.memory_space<vmem>>, vector<4x1xf32>
    %6 = vector.broadcast %5 : vector<4x1xf32> to vector<4x512xf32>
    %7 = arith.addf %4, %6 : vector<4x512xf32>
    %cst = arith.constant 0.000000e+00 : f32
    %8 = vector.broadcast %cst : f32 to vector<4x512xf32>
    %9 = arith.maximumf %7, %8 : vector<4x512xf32>
    %10 = arith.truncf %9 : vector<4x512xf32> to vector<4x512xbf16>
    %c0_5 = arith.constant 0 : index
    %c0_6 = arith.constant 0 : index
    %11 = vector.load %arg4[%c0_5, %c0_6] : memref<4x512xbf16, #tpu.memory_space<vmem>>, vector<4x512xbf16>
    tpu.vector_store %arg4[%c0_5, %c0_6], %10 {strides = array<i32>} : memref<4x512xbf16, #tpu.memory_space<vmem>>, vector<4x512xbf16>,
    return
  }
  func.func @transform_0(%arg0: i32) -> (i32, i32) {
    %c0_i32 = arith.constant 0 : i32
    %c0_i32_0 = arith.constant 0 : i32
    return %c0_i32, %arg0 : i32, i32
  }
  func.func @transform_1(%arg0: i32) -> (i32, i32) {
    %c0_i32 = arith.constant 0 : i32
    %c0_i32_0 = arith.constant 0 : i32
    %c0_i32_1 = arith.constant 0 : i32
    return %c0_i32, %c0_i32_0 : i32, i32
  }
  func.func @transform_2(%arg0: i32) -> (i32, i32) {
    %c0_i32 = arith.constant 0 : i32
    %c0_i32_0 = arith.constant 0 : i32
    %c0_i32_1 = arith.constant 0 : i32
    return %c0_i32, %c0_i32_0 : i32, i32
  }
  func.func @transform_3(%arg0: i32) -> (i32, i32) {
    %c0_i32 = arith.constant 0 : i32
    %c0_i32_0 = arith.constant 0 : i32
    return %c0_i32, %arg0 : i32, i32
  }
}

module attributes {stable_mosaic.version = 11 : i64} {
  func.func @_matmul_stats_kernel(%arg0: i32, %arg1: memref<64x32xbf16, #tpu.memory_space<vmem>>, %arg2: memref<32x128xbf16, #tpu.memory_space<vmem>>, %arg3: memref<64x128xbf16, #tpu.memory_space<vmem>>, %arg4: memref<64x1xf32, #tpu.memory_space<vmem>>, %arg5: memref<64x1xf32, #tpu.memory_space<vmem>>) attributes {dimension_semantics = [#tpu.dimension_semantics<arbitrary>], iteration_bounds = array<i64: 1>, scalar_prefetch = 0 : i64, scratch_operands = 0 : i64, tpu.core_type = #tpu.core_type<tc>, window_params = [{pipeline_mode = #tpu.pipeline_mode<synchronous>, transform_indices = @transform_0, window_bounds = array<i64: 64, 32>}, {transform_indices = @transform_1, window_bounds = array<i64: 32, 128>}, {transform_indices = @transform_2, window_bounds = array<i64: 64, 128>}, {pipeline_mode = #tpu.pipeline_mode<synchronous>, transform_indices = @transform_3, window_bounds = array<i64: 64, 1>}, {pipeline_mode = #tpu.pipeline_mode<synchronous>, transform_indices = @transform_4, window_bounds = array<i64: 64, 1>}]} {
    %c0 = arith.constant 0 : index
    %c0_0 = arith.constant 0 : index
    %0 = vector.load %arg1[%c0, %c0_0] : memref<64x32xbf16, #tpu.memory_space<vmem>>, vector<64x32xbf16>
    %c0_1 = arith.constant 0 : index
    %c0_2 = arith.constant 0 : index
    %1 = vector.load %arg2[%c0_1, %c0_2] : memref<32x128xbf16, #tpu.memory_space<vmem>>, vector<32x128xbf16>
    %cst = arith.constant dense<0.000000e+00> : vector<64x128xf32>
    %2 = tpu.matmul %0, %1, %cst {dimension_numbers = #tpu.dot_dimension_numbers<[1], [0], [0], [1], [0, 0, 1, 1], [], []>} : vector<64x32xbf16>, vector<32x128xbf16>, vector<64x128xf32> -> vector<64x128xf32>
    %3 = arith.truncf %2 : vector<64x128xf32> to vector<64x128xbf16>
    %c0_3 = arith.constant 0 : index
    %c0_4 = arith.constant 0 : index
    %4 = vector.load %arg3[%c0_3, %c0_4] : memref<64x128xbf16, #tpu.memory_space<vmem>>, vector<64x128xbf16>
    tpu.vector_store %arg3[%c0_3, %c0_4], %3 {strides = array<i32>} : memref<64x128xbf16, #tpu.memory_space<vmem>>, vector<64x128xbf16>,
    %c0_i32 = arith.constant 0 : i32
    %5 = arith.cmpi eq, %arg0, %c0_i32 : i32
    %6 = arith.extui %5 : i1 to i32
    %c0_i32_5 = arith.constant 0 : i32
    %7 = arith.cmpi ne, %6, %c0_i32_5 : i32
    scf.if %7 {
      %cst_16 = arith.constant 0.000000e+00 : f32
      %19 = vector.broadcast %cst_16 : f32 to vector<64x1xf32>
      %c0_17 = arith.constant 0 : index
      %c0_18 = arith.constant 0 : index
      %20 = vector.load %arg4[%c0_17, %c0_18] : memref<64x1xf32, #tpu.memory_space<vmem>>, vector<64x1xf32>
      tpu.vector_store %arg4[%c0_17, %c0_18], %19 {strides = array<i32>} : memref<64x1xf32, #tpu.memory_space<vmem>>, vector<64x1xf32>,
      %cst_19 = arith.constant 0.000000e+00 : f32
      %21 = vector.broadcast %cst_19 : f32 to vector<64x1xf32>
      %c0_20 = arith.constant 0 : index
      %c0_21 = arith.constant 0 : index
      %22 = vector.load %arg5[%c0_20, %c0_21] : memref<64x1xf32, #tpu.memory_space<vmem>>, vector<64x1xf32>
      tpu.vector_store %arg5[%c0_20, %c0_21], %21 {strides = array<i32>} : memref<64x1xf32, #tpu.memory_space<vmem>>, vector<64x1xf32>,
    } else {
    }
    %c0_6 = arith.constant 0 : index
    %c0_7 = arith.constant 0 : index
    %8 = vector.load %arg4[%c0_6, %c0_7] : memref<64x1xf32, #tpu.memory_space<vmem>>, vector<64x1xf32>
    %cst_8 = arith.constant dense<0.000000e+00> : vector<64xf32>
    %9 = vector.multi_reduction <add>, %2, %cst_8 [1] : vector<64x128xf32> to vector<64xf32>
    %10 = vector.shape_cast %9 : vector<64xf32> to vector<64x1xf32>
    %11 = arith.addf %8, %10 : vector<64x1xf32>
    %c0_9 = arith.constant 0 : index
    %c0_10 = arith.constant 0 : index
    %12 = vector.load %arg4[%c0_9, %c0_10] : memref<64x1xf32, #tpu.memory_space<vmem>>, vector<64x1xf32>
    tpu.vector_store %arg4[%c0_9, %c0_10], %11 {strides = array<i32>} : memref<64x1xf32, #tpu.memory_space<vmem>>, vector<64x1xf32>,
    %c0_11 = arith.constant 0 : index
    %c0_12 = arith.constant 0 : index
    %13 = vector.load %arg5[%c0_11, %c0_12] : memref<64x1xf32, #tpu.memory_space<vmem>>, vector<64x1xf32>
    %14 = arith.mulf %2, %2 : vector<64x128xf32>
    %cst_13 = arith.constant dense<0.000000e+00> : vector<64xf32>
    %15 = vector.multi_reduction <add>, %14, %cst_13 [1] : vector<64x128xf32> to vector<64xf32>
    %16 = vector.shape_cast %15 : vector<64xf32> to vector<64x1xf32>
    %17 = arith.addf %13, %16 : vector<64x1xf32>
    %c0_14 = arith.constant 0 : index
    %c0_15 = arith.constant 0 : index
    %18 = vector.load %arg5[%c0_14, %c0_15] : memref<64x1xf32, #tpu.memory_space<vmem>>, vector<64x1xf32>
    tpu.vector_store %arg5[%c0_14, %c0_15], %17 {strides = array<i32>} : memref<64x1xf32, #tpu.memory_space<vmem>>, vector<64x1xf32>,
    return
  }
  func.func @transform_0(%arg0: i32) -> (i32, i32) {
    %c0_i32 = arith.constant 0 : i32
    %c0_i32_0 = arith.constant 0 : i32
    %c0_i32_1 = arith.constant 0 : i32
    return %c0_i32, %c0_i32_0 : i32, i32
  }
  func.func @transform_1(%arg0: i32) -> (i32, i32) {
    %c0_i32 = arith.constant 0 : i32
    %c0_i32_0 = arith.constant 0 : i32
    return %c0_i32, %arg0 : i32, i32
  }
  func.func @transform_2(%arg0: i32) -> (i32, i32) {
    %c0_i32 = arith.constant 0 : i32
    %c0_i32_0 = arith.constant 0 : i32
    return %c0_i32, %arg0 : i32, i32
  }
  func.func @transform_3(%arg0: i32) -> (i32, i32) {
    %c0_i32 = arith.constant 0 : i32
    %c0_i32_0 = arith.constant 0 : i32
    %c0_i32_1 = arith.constant 0 : i32
    return %c0_i32, %c0_i32_0 : i32, i32
  }
  func.func @transform_4(%arg0: i32) -> (i32, i32) {
    %c0_i32 = arith.constant 0 : i32
    %c0_i32_0 = arith.constant 0 : i32
    %c0_i32_1 = arith.constant 0 : i32
    return %c0_i32, %c0_i32_0 : i32, i32
  }
}

module attributes {stable_mosaic.version = 11 : i64} {
  func.func @_bn_relu_dot_kernel(%arg0: i32, %arg1: memref<64x64xbf16, #tpu.memory_space<vmem>>, %arg2: memref<64x128xbf16, #tpu.memory_space<vmem>>, %arg3: memref<64x1xf32, #tpu.memory_space<vmem>>, %arg4: memref<64x1xf32, #tpu.memory_space<vmem>>, %arg5: memref<64x128xbf16, #tpu.memory_space<vmem>>) attributes {dimension_semantics = [#tpu.dimension_semantics<parallel>], iteration_bounds = array<i64: 1>, scalar_prefetch = 0 : i64, scratch_operands = 0 : i64, tpu.core_type = #tpu.core_type<tc>, window_params = [{pipeline_mode = #tpu.pipeline_mode<synchronous>, transform_indices = @transform_0, window_bounds = array<i64: 64, 64>}, {transform_indices = @transform_1, window_bounds = array<i64: 64, 128>}, {pipeline_mode = #tpu.pipeline_mode<synchronous>, transform_indices = @transform_2, window_bounds = array<i64: 64, 1>}, {pipeline_mode = #tpu.pipeline_mode<synchronous>, transform_indices = @transform_3, window_bounds = array<i64: 64, 1>}, {transform_indices = @transform_4, window_bounds = array<i64: 64, 128>}]} {
    %c0 = arith.constant 0 : index
    %c0_0 = arith.constant 0 : index
    %0 = vector.load %arg2[%c0, %c0_0] : memref<64x128xbf16, #tpu.memory_space<vmem>>, vector<64x128xbf16>
    %1 = arith.extf %0 : vector<64x128xbf16> to vector<64x128xf32>
    %c0_1 = arith.constant 0 : index
    %c0_2 = arith.constant 0 : index
    %2 = vector.load %arg3[%c0_1, %c0_2] : memref<64x1xf32, #tpu.memory_space<vmem>>, vector<64x1xf32>
    %3 = vector.broadcast %2 : vector<64x1xf32> to vector<64x128xf32>
    %4 = arith.mulf %1, %3 : vector<64x128xf32>
    %c0_3 = arith.constant 0 : index
    %c0_4 = arith.constant 0 : index
    %5 = vector.load %arg4[%c0_3, %c0_4] : memref<64x1xf32, #tpu.memory_space<vmem>>, vector<64x1xf32>
    %6 = vector.broadcast %5 : vector<64x1xf32> to vector<64x128xf32>
    %7 = arith.addf %4, %6 : vector<64x128xf32>
    %cst = arith.constant 0.000000e+00 : f32
    %8 = vector.broadcast %cst : f32 to vector<64x128xf32>
    %9 = arith.maximumf %7, %8 : vector<64x128xf32>
    %10 = arith.truncf %9 : vector<64x128xf32> to vector<64x128xbf16>
    %c0_5 = arith.constant 0 : index
    %c0_6 = arith.constant 0 : index
    %11 = vector.load %arg1[%c0_5, %c0_6] : memref<64x64xbf16, #tpu.memory_space<vmem>>, vector<64x64xbf16>
    %cst_7 = arith.constant dense<0.000000e+00> : vector<64x128xf32>
    %12 = tpu.matmul %11, %10, %cst_7 {dimension_numbers = #tpu.dot_dimension_numbers<[1], [0], [0], [1], [0, 0, 1, 1], [], []>} : vector<64x64xbf16>, vector<64x128xbf16>, vector<64x128xf32> -> vector<64x128xf32>
    %13 = arith.truncf %12 : vector<64x128xf32> to vector<64x128xbf16>
    %c0_8 = arith.constant 0 : index
    %c0_9 = arith.constant 0 : index
    %14 = vector.load %arg5[%c0_8, %c0_9] : memref<64x128xbf16, #tpu.memory_space<vmem>>, vector<64x128xbf16>
    tpu.vector_store %arg5[%c0_8, %c0_9], %13 {strides = array<i32>} : memref<64x128xbf16, #tpu.memory_space<vmem>>, vector<64x128xbf16>,
    return
  }
  func.func @transform_0(%arg0: i32) -> (i32, i32) {
    %c0_i32 = arith.constant 0 : i32
    %c0_i32_0 = arith.constant 0 : i32
    %c0_i32_1 = arith.constant 0 : i32
    return %c0_i32, %c0_i32_0 : i32, i32
  }
  func.func @transform_1(%arg0: i32) -> (i32, i32) {
    %c0_i32 = arith.constant 0 : i32
    %c0_i32_0 = arith.constant 0 : i32
    return %c0_i32, %arg0 : i32, i32
  }
  func.func @transform_2(%arg0: i32) -> (i32, i32) {
    %c0_i32 = arith.constant 0 : i32
    %c0_i32_0 = arith.constant 0 : i32
    %c0_i32_1 = arith.constant 0 : i32
    return %c0_i32, %c0_i32_0 : i32, i32
  }
  func.func @transform_3(%arg0: i32) -> (i32, i32) {
    %c0_i32 = arith.constant 0 : i32
    %c0_i32_0 = arith.constant 0 : i32
    %c0_i32_1 = arith.constant 0 : i32
    return %c0_i32, %c0_i32_0 : i32, i32
  }
  func.func @transform_4(%arg0: i32) -> (i32, i32) {
    %c0_i32 = arith.constant 0 : i32
    %c0_i32_0 = arith.constant 0 : i32
    return %c0_i32, %arg0 : i32, i32
  }
}

module attributes {stable_mosaic.version = 11 : i64} {
  func.func @_matmul_stats_kernel(%arg0: i32, %arg1: memref<128x64xbf16, #tpu.memory_space<vmem>>, %arg2: memref<64x128xbf16, #tpu.memory_space<vmem>>, %arg3: memref<128x128xbf16, #tpu.memory_space<vmem>>, %arg4: memref<128x1xf32, #tpu.memory_space<vmem>>, %arg5: memref<128x1xf32, #tpu.memory_space<vmem>>) attributes {dimension_semantics = [#tpu.dimension_semantics<arbitrary>], iteration_bounds = array<i64: 1>, scalar_prefetch = 0 : i64, scratch_operands = 0 : i64, tpu.core_type = #tpu.core_type<tc>, window_params = [{pipeline_mode = #tpu.pipeline_mode<synchronous>, transform_indices = @transform_0, window_bounds = array<i64: 128, 64>}, {transform_indices = @transform_1, window_bounds = array<i64: 64, 128>}, {transform_indices = @transform_2, window_bounds = array<i64: 128, 128>}, {pipeline_mode = #tpu.pipeline_mode<synchronous>, transform_indices = @transform_3, window_bounds = array<i64: 128, 1>}, {pipeline_mode = #tpu.pipeline_mode<synchronous>, transform_indices = @transform_4, window_bounds = array<i64: 128, 1>}]} {
    %c0 = arith.constant 0 : index
    %c0_0 = arith.constant 0 : index
    %0 = vector.load %arg1[%c0, %c0_0] : memref<128x64xbf16, #tpu.memory_space<vmem>>, vector<128x64xbf16>
    %c0_1 = arith.constant 0 : index
    %c0_2 = arith.constant 0 : index
    %1 = vector.load %arg2[%c0_1, %c0_2] : memref<64x128xbf16, #tpu.memory_space<vmem>>, vector<64x128xbf16>
    %cst = arith.constant dense<0.000000e+00> : vector<128x128xf32>
    %2 = tpu.matmul %0, %1, %cst {dimension_numbers = #tpu.dot_dimension_numbers<[1], [0], [0], [1], [0, 0, 1, 1], [], []>} : vector<128x64xbf16>, vector<64x128xbf16>, vector<128x128xf32> -> vector<128x128xf32>
    %3 = arith.truncf %2 : vector<128x128xf32> to vector<128x128xbf16>
    %c0_3 = arith.constant 0 : index
    %c0_4 = arith.constant 0 : index
    %4 = vector.load %arg3[%c0_3, %c0_4] : memref<128x128xbf16, #tpu.memory_space<vmem>>, vector<128x128xbf16>
    tpu.vector_store %arg3[%c0_3, %c0_4], %3 {strides = array<i32>} : memref<128x128xbf16, #tpu.memory_space<vmem>>, vector<128x128xbf16>,
    %c0_i32 = arith.constant 0 : i32
    %5 = arith.cmpi eq, %arg0, %c0_i32 : i32
    %6 = arith.extui %5 : i1 to i32
    %c0_i32_5 = arith.constant 0 : i32
    %7 = arith.cmpi ne, %6, %c0_i32_5 : i32
    scf.if %7 {
      %cst_16 = arith.constant 0.000000e+00 : f32
      %19 = vector.broadcast %cst_16 : f32 to vector<128x1xf32>
      %c0_17 = arith.constant 0 : index
      %c0_18 = arith.constant 0 : index
      %20 = vector.load %arg4[%c0_17, %c0_18] : memref<128x1xf32, #tpu.memory_space<vmem>>, vector<128x1xf32>
      tpu.vector_store %arg4[%c0_17, %c0_18], %19 {strides = array<i32>} : memref<128x1xf32, #tpu.memory_space<vmem>>, vector<128x1xf32>,
      %cst_19 = arith.constant 0.000000e+00 : f32
      %21 = vector.broadcast %cst_19 : f32 to vector<128x1xf32>
      %c0_20 = arith.constant 0 : index
      %c0_21 = arith.constant 0 : index
      %22 = vector.load %arg5[%c0_20, %c0_21] : memref<128x1xf32, #tpu.memory_space<vmem>>, vector<128x1xf32>
      tpu.vector_store %arg5[%c0_20, %c0_21], %21 {strides = array<i32>} : memref<128x1xf32, #tpu.memory_space<vmem>>, vector<128x1xf32>,
    } else {
    }
    %c0_6 = arith.constant 0 : index
    %c0_7 = arith.constant 0 : index
    %8 = vector.load %arg4[%c0_6, %c0_7] : memref<128x1xf32, #tpu.memory_space<vmem>>, vector<128x1xf32>
    %cst_8 = arith.constant dense<0.000000e+00> : vector<128xf32>
    %9 = vector.multi_reduction <add>, %2, %cst_8 [1] : vector<128x128xf32> to vector<128xf32>
    %10 = vector.shape_cast %9 : vector<128xf32> to vector<128x1xf32>
    %11 = arith.addf %8, %10 : vector<128x1xf32>
    %c0_9 = arith.constant 0 : index
    %c0_10 = arith.constant 0 : index
    %12 = vector.load %arg4[%c0_9, %c0_10] : memref<128x1xf32, #tpu.memory_space<vmem>>, vector<128x1xf32>
    tpu.vector_store %arg4[%c0_9, %c0_10], %11 {strides = array<i32>} : memref<128x1xf32, #tpu.memory_space<vmem>>, vector<128x1xf32>,
    %c0_11 = arith.constant 0 : index
    %c0_12 = arith.constant 0 : index
    %13 = vector.load %arg5[%c0_11, %c0_12] : memref<128x1xf32, #tpu.memory_space<vmem>>, vector<128x1xf32>
    %14 = arith.mulf %2, %2 : vector<128x128xf32>
    %cst_13 = arith.constant dense<0.000000e+00> : vector<128xf32>
    %15 = vector.multi_reduction <add>, %14, %cst_13 [1] : vector<128x128xf32> to vector<128xf32>
    %16 = vector.shape_cast %15 : vector<128xf32> to vector<128x1xf32>
    %17 = arith.addf %13, %16 : vector<128x1xf32>
    %c0_14 = arith.constant 0 : index
    %c0_15 = arith.constant 0 : index
    %18 = vector.load %arg5[%c0_14, %c0_15] : memref<128x1xf32, #tpu.memory_space<vmem>>, vector<128x1xf32>
    tpu.vector_store %arg5[%c0_14, %c0_15], %17 {strides = array<i32>} : memref<128x1xf32, #tpu.memory_space<vmem>>, vector<128x1xf32>,
    return
  }
  func.func @transform_0(%arg0: i32) -> (i32, i32) {
    %c0_i32 = arith.constant 0 : i32
    %c0_i32_0 = arith.constant 0 : i32
    %c0_i32_1 = arith.constant 0 : i32
    return %c0_i32, %c0_i32_0 : i32, i32
  }
  func.func @transform_1(%arg0: i32) -> (i32, i32) {
    %c0_i32 = arith.constant 0 : i32
    %c0_i32_0 = arith.constant 0 : i32
    return %c0_i32, %arg0 : i32, i32
  }
  func.func @transform_2(%arg0: i32) -> (i32, i32) {
    %c0_i32 = arith.constant 0 : i32
    %c0_i32_0 = arith.constant 0 : i32
    return %c0_i32, %arg0 : i32, i32
  }
  func.func @transform_3(%arg0: i32) -> (i32, i32) {
    %c0_i32 = arith.constant 0 : i32
    %c0_i32_0 = arith.constant 0 : i32
    %c0_i32_1 = arith.constant 0 : i32
    return %c0_i32, %c0_i32_0 : i32, i32
  }
  func.func @transform_4(%arg0: i32) -> (i32, i32) {
    %c0_i32 = arith.constant 0 : i32
    %c0_i32_0 = arith.constant 0 : i32
    %c0_i32_1 = arith.constant 0 : i32
    return %c0_i32, %c0_i32_0 : i32, i32
  }
}

module attributes {stable_mosaic.version = 11 : i64} {
  func.func @_bn_relu_dot_kernel(%arg0: i32, %arg1: memref<64x128xbf16, #tpu.memory_space<vmem>>, %arg2: memref<128x128xbf16, #tpu.memory_space<vmem>>, %arg3: memref<128x1xf32, #tpu.memory_space<vmem>>, %arg4: memref<128x1xf32, #tpu.memory_space<vmem>>, %arg5: memref<64x128xbf16, #tpu.memory_space<vmem>>) attributes {dimension_semantics = [#tpu.dimension_semantics<parallel>], iteration_bounds = array<i64: 1>, scalar_prefetch = 0 : i64, scratch_operands = 0 : i64, tpu.core_type = #tpu.core_type<tc>, window_params = [{pipeline_mode = #tpu.pipeline_mode<synchronous>, transform_indices = @transform_0, window_bounds = array<i64: 64, 128>}, {transform_indices = @transform_1, window_bounds = array<i64: 128, 128>}, {pipeline_mode = #tpu.pipeline_mode<synchronous>, transform_indices = @transform_2, window_bounds = array<i64: 128, 1>}, {pipeline_mode = #tpu.pipeline_mode<synchronous>, transform_indices = @transform_3, window_bounds = array<i64: 128, 1>}, {transform_indices = @transform_4, window_bounds = array<i64: 64, 128>}]} {
    %c0 = arith.constant 0 : index
    %c0_0 = arith.constant 0 : index
    %0 = vector.load %arg2[%c0, %c0_0] : memref<128x128xbf16, #tpu.memory_space<vmem>>, vector<128x128xbf16>
    %1 = arith.extf %0 : vector<128x128xbf16> to vector<128x128xf32>
    %c0_1 = arith.constant 0 : index
    %c0_2 = arith.constant 0 : index
    %2 = vector.load %arg3[%c0_1, %c0_2] : memref<128x1xf32, #tpu.memory_space<vmem>>, vector<128x1xf32>
    %3 = vector.broadcast %2 : vector<128x1xf32> to vector<128x128xf32>
    %4 = arith.mulf %1, %3 : vector<128x128xf32>
    %c0_3 = arith.constant 0 : index
    %c0_4 = arith.constant 0 : index
    %5 = vector.load %arg4[%c0_3, %c0_4] : memref<128x1xf32, #tpu.memory_space<vmem>>, vector<128x1xf32>
    %6 = vector.broadcast %5 : vector<128x1xf32> to vector<128x128xf32>
    %7 = arith.addf %4, %6 : vector<128x128xf32>
    %cst = arith.constant 0.000000e+00 : f32
    %8 = vector.broadcast %cst : f32 to vector<128x128xf32>
    %9 = arith.maximumf %7, %8 : vector<128x128xf32>
    %10 = arith.truncf %9 : vector<128x128xf32> to vector<128x128xbf16>
    %c0_5 = arith.constant 0 : index
    %c0_6 = arith.constant 0 : index
    %11 = vector.load %arg1[%c0_5, %c0_6] : memref<64x128xbf16, #tpu.memory_space<vmem>>, vector<64x128xbf16>
    %cst_7 = arith.constant dense<0.000000e+00> : vector<64x128xf32>
    %12 = tpu.matmul %11, %10, %cst_7 {dimension_numbers = #tpu.dot_dimension_numbers<[1], [0], [0], [1], [0, 0, 1, 1], [], []>} : vector<64x128xbf16>, vector<128x128xbf16>, vector<64x128xf32> -> vector<64x128xf32>
    %13 = arith.truncf %12 : vector<64x128xf32> to vector<64x128xbf16>
    %c0_8 = arith.constant 0 : index
    %c0_9 = arith.constant 0 : index
    %14 = vector.load %arg5[%c0_8, %c0_9] : memref<64x128xbf16, #tpu.memory_space<vmem>>, vector<64x128xbf16>
    tpu.vector_store %arg5[%c0_8, %c0_9], %13 {strides = array<i32>} : memref<64x128xbf16, #tpu.memory_space<vmem>>, vector<64x128xbf16>,
    return
  }
  func.func @transform_0(%arg0: i32) -> (i32, i32) {
    %c0_i32 = arith.constant 0 : i32
    %c0_i32_0 = arith.constant 0 : i32
    %c0_i32_1 = arith.constant 0 : i32
    return %c0_i32, %c0_i32_0 : i32, i32
  }
  func.func @transform_1(%arg0: i32) -> (i32, i32) {
    %c0_i32 = arith.constant 0 : i32
    %c0_i32_0 = arith.constant 0 : i32
    return %c0_i32, %arg0 : i32, i32
  }
  func.func @transform_2(%arg0: i32) -> (i32, i32) {
    %c0_i32 = arith.constant 0 : i32
    %c0_i32_0 = arith.constant 0 : i32
    %c0_i32_1 = arith.constant 0 : i32
    return %c0_i32, %c0_i32_0 : i32, i32
  }
  func.func @transform_3(%arg0: i32) -> (i32, i32) {
    %c0_i32 = arith.constant 0 : i32
    %c0_i32_0 = arith.constant 0 : i32
    %c0_i32_1 = arith.constant 0 : i32
    return %c0_i32, %c0_i32_0 : i32, i32
  }
  func.func @transform_4(%arg0: i32) -> (i32, i32) {
    %c0_i32 = arith.constant 0 : i32
    %c0_i32_0 = arith.constant 0 : i32
    return %c0_i32, %arg0 : i32, i32
  }
}

module attributes {stable_mosaic.version = 11 : i64} {
  func.func @_add3_conv_kernel(%arg0: i32, %arg1: memref<8x4xbf16, #tpu.memory_space<vmem>>, %arg2: memref<4x512xbf16, #tpu.memory_space<vmem>>, %arg3: memref<4x512xbf16, #tpu.memory_space<vmem>>, %arg4: memref<4x512xbf16, #tpu.memory_space<vmem>>, %arg5: memref<8x512xbf16, #tpu.memory_space<vmem>>) attributes {dimension_semantics = [#tpu.dimension_semantics<parallel>], iteration_bounds = array<i64: 1>, scalar_prefetch = 0 : i64, scratch_operands = 0 : i64, tpu.core_type = #tpu.core_type<tc>, window_params = [{pipeline_mode = #tpu.pipeline_mode<synchronous>, transform_indices = @transform_0, window_bounds = array<i64: 8, 4>}, {transform_indices = @transform_1, window_bounds = array<i64: 4, 512>}, {transform_indices = @transform_2, window_bounds = array<i64: 4, 512>}, {transform_indices = @transform_3, window_bounds = array<i64: 4, 512>}, {transform_indices = @transform_4, window_bounds = array<i64: 8, 512>}]} {
    %c0 = arith.constant 0 : index
    %c0_0 = arith.constant 0 : index
    %0 = vector.load %arg2[%c0, %c0_0] : memref<4x512xbf16, #tpu.memory_space<vmem>>, vector<4x512xbf16>
    %c0_1 = arith.constant 0 : index
    %c0_2 = arith.constant 0 : index
    %1 = vector.load %arg3[%c0_1, %c0_2] : memref<4x512xbf16, #tpu.memory_space<vmem>>, vector<4x512xbf16>
    %2 = arith.addf %0, %1 : vector<4x512xbf16>
    %c0_3 = arith.constant 0 : index
    %c0_4 = arith.constant 0 : index
    %3 = vector.load %arg4[%c0_3, %c0_4] : memref<4x512xbf16, #tpu.memory_space<vmem>>, vector<4x512xbf16>
    %4 = arith.addf %2, %3 : vector<4x512xbf16>
    %c0_5 = arith.constant 0 : index
    %c0_6 = arith.constant 0 : index
    %5 = vector.load %arg1[%c0_5, %c0_6] : memref<8x4xbf16, #tpu.memory_space<vmem>>, vector<8x4xbf16>
    %cst = arith.constant dense<0.000000e+00> : vector<8x512xf32>
    %6 = tpu.matmul %5, %4, %cst {dimension_numbers = #tpu.dot_dimension_numbers<[1], [0], [0], [1], [0, 0, 1, 1], [], []>} : vector<8x4xbf16>, vector<4x512xbf16>, vector<8x512xf32> -> vector<8x512xf32>
    %7 = arith.truncf %6 : vector<8x512xf32> to vector<8x512xbf16>
    %c0_7 = arith.constant 0 : index
    %c0_8 = arith.constant 0 : index
    %8 = vector.load %arg5[%c0_7, %c0_8] : memref<8x512xbf16, #tpu.memory_space<vmem>>, vector<8x512xbf16>
    tpu.vector_store %arg5[%c0_7, %c0_8], %7 {strides = array<i32>} : memref<8x512xbf16, #tpu.memory_space<vmem>>, vector<8x512xbf16>,
    return
  }
  func.func @transform_0(%arg0: i32) -> (i32, i32) {
    %c0_i32 = arith.constant 0 : i32
    %c0_i32_0 = arith.constant 0 : i32
    %c0_i32_1 = arith.constant 0 : i32
    return %c0_i32, %c0_i32_0 : i32, i32
  }
  func.func @transform_1(%arg0: i32) -> (i32, i32) {
    %c0_i32 = arith.constant 0 : i32
    %c0_i32_0 = arith.constant 0 : i32
    return %c0_i32, %arg0 : i32, i32
  }
  func.func @transform_2(%arg0: i32) -> (i32, i32) {
    %c0_i32 = arith.constant 0 : i32
    %c0_i32_0 = arith.constant 0 : i32
    return %c0_i32, %arg0 : i32, i32
  }
  func.func @transform_3(%arg0: i32) -> (i32, i32) {
    %c0_i32 = arith.constant 0 : i32
    %c0_i32_0 = arith.constant 0 : i32
    return %c0_i32, %arg0 : i32, i32
  }
  func.func @transform_4(%arg0: i32) -> (i32, i32) {
    %c0_i32 = arith.constant 0 : i32
    %c0_i32_0 = arith.constant 0 : i32
    return %c0_i32, %arg0 : i32, i32
  }
}

</mosaic_0001>

<llo_original>
// kernel: spectral_transform.8
$region0: #{spectral_transform.8}
  #allocation0 [shape = 'u32[]', space=smem, size = 0x4, offset = 0x4, fixed_abs, tag = 'smem constant byte address 0x4 - core index']
  #allocation1 [shape = 'u32[144,128]{1,0:T(1,128)}', space=vmem, size = 0x12000, scoped, tag = 'internal scratch']
  %s0 = inlined_call_operand.vmem [shape: bf16[4,512], index: 0, kind: input, shape index: {}]
  %s1 = inlined_call_operand.vmem [shape: f32[4,1], index: 1, kind: input, shape index: {}]
  %s2 = inlined_call_operand.vmem [shape: f32[4,1], index: 2, kind: input, shape index: {}]
  %s3 = inlined_call_operand.vmem [shape: bf16[4,512], index: 3, kind: output, shape index: {}]
  %s4 = sld [smem:[#allocation0]]
  $region22: #{spectral_transform.8} parent=0
    _
  %s6 = ssub.s32 1, %s4
  %s7 = scalar_select 0, %s6, %s4
  // Predicated region
  $region2: #{spectral_transform.8} parent=0 // pred_check
    _
  $region3: #{spectral_transform.8} parent=0 // pred_check_branch
    %9 = sbr.rel (0) target = $region5
  $region4: #{spectral_transform.8} parent=0 // pred_region
    _
  $region5: #{spectral_transform.8} parent=0 // pred_fallthru
    _
  // Predicated region
  $region6: #{spectral_transform.8} parent=0 // pred_check
    _
  $region7: #{spectral_transform.8} parent=0 // pred_check_branch
    %11 = sbr.rel (0) target = $region9
  $region8: #{spectral_transform.8} parent=0 // pred_region
    _
  $region9: #{spectral_transform.8} parent=0 // pred_fallthru
    _
  // Predicated region
  $region10: #{spectral_transform.8} parent=0 // pred_check
    _
  $region11: #{spectral_transform.8} parent=0 // pred_check_branch
    %13 = sbr.rel (0) target = $region13
  $region12: #{spectral_transform.8} parent=0 // pred_region
    _
  $region13: #{spectral_transform.8} parent=0 // pred_fallthru
    _
  %v14 = vld [vmem:[%s0] sm:$0xff]
  %v15 = vunpack.c.l.bf16 %v14
  %v16 = vunpack.c.h.bf16 %v14
  %v17 = vld [vmem:[%s1] sm:$0xf]
  %19 = vset.pattern.permute.xlu0 0
  %20 = vperm.xlu0 %19, %v17
  %v21 = vpop.permute.xlu0 %20
  %v23 = vunpack.c.l.s4 839922192
  %v24 = vunpack.c.0.s8 %v23
  %v25 = vlaneseq
  %v26 = vshrl.u32 %v25, 7
  %v27 = vsub.s32 %v24, %v26
  %v28 = vrot.slane %v21, %v27
  %v30 = vmul.f32 %v15, %v28
  %v31 = vmul.f32 %v16, %v28
  %v32 = vld [vmem:[%s2] sm:$0xf]
  %34 = vset.pattern.permute.xlu0 0
  %35 = vperm.xlu0 %34, %v32
  %v36 = vpop.permute.xlu0 %35
  %v38 = vunpack.c.l.s4 839922192
  %v39 = vunpack.c.0.s8 %v38
  %v40 = vlaneseq
  %v41 = vshrl.u32 %v40, 7
  %v42 = vsub.s32 %v39, %v41
  %v43 = vrot.slane %v36, %v42
  %v45 = vadd.f32 %v30, %v43
  %v46 = vadd.f32 %v31, %v43
  %v47 = vmax.f32 %v45, 0.0
  %v48 = vmax.f32 %v46, 0.0
  %v51 = vcombine.high %v47, %v47
  %v52 = vcombine.high %v48, %v48
  %v55 = vpack.c.bf16 %v47, %v47
  %v56 = vpack.c.bf16 %v51, %v51
  %v57 = vpack.c.bf16 %v48, %v48
  %v58 = vpack.c.bf16 %v52, %v52
  %v63 = vcombine.low %v55, %v56
  %v64 = vcombine.low %v57, %v58
  %v66 = vunpack.c.l.s4 1983009808
  %v67 = vunpack.c.0.s8 %v66
  %v68 = vlaneseq
  %v69 = vshrl.u32 %v68, 7
  %v70 = vsub.s32 %v67, %v69
  %v71 = vrot.slane %v63, %v70
  %v73 = vunpack.c.l.s4 1983009808
  %v74 = vunpack.c.0.s8 %v73
  %v75 = vlaneseq
  %v76 = vshrl.u32 %v75, 7
  %v77 = vsub.s32 %v74, %v76
  %v78 = vrot.slane %v64, %v77
  %v79 = vcombine.low %v71, %v78
  %81 = vst [vmem:[%s3] sm:$0xff] %v79
  // Predicated region
  $region14: #{spectral_transform.8} parent=0 // pred_check
    _
  $region15: #{spectral_transform.8} parent=0 // pred_check_branch
    %83 = sbr.rel (0) target = $region17
  $region16: #{spectral_transform.8} parent=0 // pred_region
    _
  $region17: #{spectral_transform.8} parent=0 // pred_fallthru
    _
  // Predicated region
  $region18: #{spectral_transform.8} parent=0 // pred_check
    _
  $region19: #{spectral_transform.8} parent=0 // pred_check_branch
    %85 = sbr.rel (0) target = $region21
  $region20: #{spectral_transform.8} parent=0 // pred_region
    _
  $region21: #{spectral_transform.8} parent=0 // pred_fallthru
    _

// kernel: spectral_transform.7
$region0: #{spectral_transform.7}
  #allocation0 [shape = 'u32[]', space=smem, size = 0x4, offset = 0x4, fixed_abs, tag = 'smem constant byte address 0x4 - core index']
  #allocation1 [shape = 'u32[144,128]{1,0:T(1,128)}', space=vmem, size = 0x12000, scoped, tag = 'internal scratch']
  %s0 = inlined_call_operand.vmem [shape: bf16[4,4], index: 0, kind: input, shape index: {}]
  %s1 = inlined_call_operand.vmem [shape: bf16[4,512], index: 1, kind: input, shape index: {}]
  %s2 = inlined_call_operand.vmem [shape: bf16[4,512], index: 2, kind: output, shape index: {0}]
  %s3 = inlined_call_operand.vmem [shape: f32[4,1], index: 3, kind: output, shape index: {1}]
  %s4 = inlined_call_operand.vmem [shape: f32[4,1], index: 4, kind: output, shape index: {2}]
  %5 = xla_tuple %s2, %s3, %s4
  %s6 = sld [smem:[#allocation0]]
  $region38: #{spectral_transform.7} parent=0
    _
  %s8 = ssub.s32 1, %s6
  %s9 = scalar_select 0, %s8, %s6
  // Predicated region
  $region2: #{spectral_transform.7} parent=0 // pred_check
    _
  $region3: #{spectral_transform.7} parent=0 // pred_check_branch
    %11 = sbr.rel (0) target = $region5
  $region4: #{spectral_transform.7} parent=0 // pred_region
    _
  $region5: #{spectral_transform.7} parent=0 // pred_fallthru
    _
  // Predicated region
  $region6: #{spectral_transform.7} parent=0 // pred_check
    _
  $region7: #{spectral_transform.7} parent=0 // pred_check_branch
    %13 = sbr.rel (0) target = $region9
  $region8: #{spectral_transform.7} parent=0 // pred_region
    _
  $region9: #{spectral_transform.7} parent=0 // pred_fallthru
    _
  %v15 = vld [vmem:[%s0] sm:$0x3]
  %v16 = vld [vmem:[%s1] sm:$0xff]
  %v18 = vcombine.high %v16, %v16
  %v20 = vunpack.c.l.s4 1983009808
  %v21 = vunpack.c.0.s8 %v20
  %v22 = vlaneseq
  %v23 = vshrl.u32 %v22, 7
  %v24 = vsub.s32 %v21, %v23
  %v25 = vrot.slane %v16, %v24
  %v27 = vunpack.c.l.s4 1983009808
  %v28 = vunpack.c.0.s8 %v27
  %v29 = vlaneseq
  %v30 = vshrl.u32 %v29, 7
  %v31 = vsub.s32 %v28, %v30
  %v32 = vrot.slane %v18, %v31
  %v33 = vcombine.high %v25, %v25
  %v34 = vcombine.high %v32, %v32
  %vm35 = vcmask 31744
  %v37 = vsel %vm35, %v15, 0
  %vm39 = vcmask 1041408
  %v41 = vsel %vm39, %v25, 0
  %v44 = vsel %vm39, %v33, 0
  %v47 = vsel %vm39, %v32, 0
  %v50 = vsel %vm39, %v34, 0
  %52 = vmatprep.subr.bf16.mxu0 0
  %53 = vmatpush1.bf16.msra.mxu0 0
  %54 = vmatprep.subr.bf16.mxu0 0
  %55 = vmatpush1.bf16.msra.mxu0 0
  %56 = vmatprep.subr.bf16.mxu0 0
  %57 = vmatpush1.bf16.msra.mxu0 0
  %58 = vmatprep.subr.bf16.mxu0 0
  %59 = vmatpush1.bf16.msra.mxu0 0
  %60 = vmatprep.subr.bf16.mxu0 0
  %61 = vmatpush1.bf16.msra.mxu0 0
  %62 = vmatprep.subr.bf16.mxu0 0
  %63 = vmatpush1.bf16.msra.mxu0 0
  %64 = vmatprep.subr.bf16.mxu0 0
  %65 = vmatpush1.bf16.msra.mxu0 0
  %66 = vmatprep.subr.bf16.mxu0 %v44
  %67 = vmatpush1.bf16.msra.mxu0 %v41
  %68 = vmatprep.subr.bf16.mxu0 0
  %69 = vmatpush2.bf16.msra.mxu0 0
  %70 = vmatprep.subr.bf16.mxu0 0
  %71 = vmatpush2.bf16.msra.mxu0 0
  %72 = vmatprep.subr.bf16.mxu0 0
  %73 = vmatpush2.bf16.msra.mxu0 0
  %74 = vmatprep.subr.bf16.mxu0 0
  %75 = vmatpush2.bf16.msra.mxu0 0
  %76 = vmatprep.subr.bf16.mxu0 0
  %77 = vmatpush2.bf16.msra.mxu0 0
  %78 = vmatprep.subr.bf16.mxu0 0
  %79 = vmatpush2.bf16.msra.mxu0 0
  %80 = vmatprep.subr.bf16.mxu0 0
  %81 = vmatpush2.bf16.msra.mxu0 0
  %82 = vmatprep.subr.bf16.mxu0 0
  %83 = vmatpush2.bf16.msra.mxu0 0
  %84 = vmatprep.mubr.bf16.mxu0 0
  %85 = vmatmul.mubr.bf16.gmra.mxu0 %v37
  %v86 = vpop.f32.mrf.mxu0
  %v87 = vadd.f32 0.0, %v86
  %v88 = vpop.f32.mrf.mxu0
  %v89 = vadd.f32 0.0, %v88
  %v90 = vpop.f32.mrf.mxu0
  %v91 = vpop.f32.mrf.mxu0
  %92 = vdwg.mxu0
  %93 = vmatprep.subr.bf16.mxu0 0
  %94 = vmatpush1.bf16.msra.mxu0 0
  %95 = vmatprep.subr.bf16.mxu0 0
  %96 = vmatpush1.bf16.msra.mxu0 0
  %97 = vmatprep.subr.bf16.mxu0 0
  %98 = vmatpush1.bf16.msra.mxu0 0
  %99 = vmatprep.subr.bf16.mxu0 0
  %100 = vmatpush1.bf16.msra.mxu0 0
  %101 = vmatprep.subr.bf16.mxu0 0
  %102 = vmatpush1.bf16.msra.mxu0 0
  %103 = vmatprep.subr.bf16.mxu0 0
  %104 = vmatpush1.bf16.msra.mxu0 0
  %105 = vmatprep.subr.bf16.mxu0 0
  %106 = vmatpush1.bf16.msra.mxu0 0
  %107 = vmatprep.subr.bf16.mxu0 %v50
  %108 = vmatpush1.bf16.msra.mxu0 %v47
  %109 = vmatprep.subr.bf16.mxu0 0
  %110 = vmatpush2.bf16.msra.mxu0 0
  %111 = vmatprep.subr.bf16.mxu0 0
  %112 = vmatpush2.bf16.msra.mxu0 0
  %113 = vmatprep.subr.bf16.mxu0 0
  %114 = vmatpush2.bf16.msra.mxu0 0
  %115 = vmatprep.subr.bf16.mxu0 0
  %116 = vmatpush2.bf16.msra.mxu0 0
  %117 = vmatprep.subr.bf16.mxu0 0
  %118 = vmatpush2.bf16.msra.mxu0 0
  %119 = vmatprep.subr.bf16.mxu0 0
  %120 = vmatpush2.bf16.msra.mxu0 0
  %121 = vmatprep.subr.bf16.mxu0 0
  %122 = vmatpush2.bf16.msra.mxu0 0
  %123 = vmatprep.subr.bf16.mxu0 0
  %124 = vmatpush2.bf16.msra.mxu0 0
  %125 = vmatprep.mubr.bf16.mxu0 0
  %126 = vmatmul.mubr.bf16.gmra.mxu0 %v37
  %v127 = vpop.f32.mrf.mxu0
  %v128 = vadd.f32 0.0, %v127
  %v129 = vpop.f32.mrf.mxu0
  %v130 = vadd.f32 0.0, %v129
  %v131 = vpop.f32.mrf.mxu0
  %v132 = vpop.f32.mrf.mxu0
  %133 = vdwg.mxu0
  %v134 = vpack.c.bf16 %v87, %v87
  %v135 = vpack.c.bf16 %v89, %v89
  %v136 = vpack.c.bf16 %v128, %v128
  %v137 = vpack.c.bf16 %v130, %v130
  %v142 = vcombine.low %v134, %v135
  %v143 = vcombine.low %v136, %v137
  %v145 = vunpack.c.l.s4 1983009808
  %v146 = vunpack.c.0.s8 %v145
  %v147 = vlaneseq
  %v148 = vshrl.u32 %v147, 7
  %v149 = vsub.s32 %v146, %v148
  %v150 = vrot.slane %v142, %v149
  %v152 = vunpack.c.l.s4 1983009808
  %v153 = vunpack.c.0.s8 %v152
  %v154 = vlaneseq
  %v155 = vshrl.u32 %v154, 7
  %v156 = vsub.s32 %v153, %v155
  %v157 = vrot.slane %v143, %v156
  %v158 = vcombine.low %v150, %v157
  %160 = vst [vmem:[%s2] sm:$0xff] %v158
  %p161 = scmp.eq.s32.totalorder 0, 0
  // Predicated region
  $region10: #{spectral_transform.7} parent=0 // pred_check
    %p162 = pneg %p161
  $region11: #{spectral_transform.7} parent=0 // pred_check_branch
    %164 = sbr.rel (%p162) target = $region13
  $region12: #{spectral_transform.7} parent=0 // pred_region
    %vm165 = vcmask 3072
    %166 = vst.msk [vmem:[%s3] sm:$0xf] %vm165, 0.0
    %167 = vst.msk [vmem:[%s4] sm:$0xf] %vm165, 0.0
  $region13: #{spectral_transform.7} parent=0 // pred_fallthru
    _
  %v168 = vld [vmem:[%s3] sm:$0xf]
  %vm169 = vcmask 1043456
  %v170 = vsel %vm169, %v87, 0.0
  %v171 = vsel %vm169, %v89, 0.0
  %v172 = vadd.f32 %v170, %v171
  %v173 = vsel %vm169, %v128, 0.0
  %v174 = vadd.f32 %v172, %v173
  %v175 = vsel %vm169, %v130, 0.0
  %v176 = vadd.f32 %v174, %v175
  %177 = vadd.xlane.f32.xlu0 %v176
  %v178 = vpop.xlane.xlu0 %177
  %v179 = vadd.f32 %v168, %v178
  %vm180 = vcmask 3072
  %181 = vst.msk [vmem:[%s3] sm:$0xf] %vm180, %v179
  %v182 = vld [vmem:[%s4] sm:$0xf]
  %v183 = vmul.f32 %v87, %v87
  %v184 = vmul.f32 %v89, %v89
  %v185 = vmul.f32 %v128, %v128
  %v186 = vmul.f32 %v130, %v130
  %v187 = vsel %vm169, %v183, 0.0
  %v188 = vsel %vm169, %v184, 0.0
  %v189 = vadd.f32 %v187, %v188
  %v190 = vsel %vm169, %v185, 0.0
  %v191 = vadd.f32 %v189, %v190
  %v192 = vsel %vm169, %v186, 0.0
  %v193 = vadd.f32 %v191, %v192
  %194 = vadd.xlane.f32.xlu0 %v193
  %v195 = vpop.xlane.xlu0 %194
  %v196 = vadd.f32 %v182, %v195
  %197 = vst.msk [vmem:[%s4] sm:$0xf] %vm180, %v196
  // Predicated region
  $region14: #{spectral_transform.7} parent=0 // pred_check
    _
  $region15: #{spectral_transform.7} parent=0 // pred_check_branch
    %199 = sbr.rel (0) target = $region17
  $region16: #{spectral_transform.7} parent=0 // pred_region
    _
  $region17: #{spectral_transform.7} parent=0 // pred_fallthru
    _
  // Predicated region
  $region18: #{spectral_transform.7} parent=0 // pred_check
    _
  $region19: #{spectral_transform.7} parent=0 // pred_check_branch
    %201 = sbr.rel (0) target = $region21
  $region20: #{spectral_transform.7} parent=0 // pred_region
    _
  $region21: #{spectral_transform.7} parent=0 // pred_fallthru
    _
  // Predicated region
  $region22: #{spectral_transform.7} parent=0 // pred_check
    _
  $region23: #{spectral_transform.7} parent=0 // pred_check_branch
    %203 = sbr.rel (0) target = $region25
  $region24: #{spectral_transform.7} parent=0 // pred_region
    _
  $region25: #{spectral_transform.7} parent=0 // pred_fallthru
    _
  // Predicated region
  $region26: #{spectral_transform.7} parent=0 // pred_check
    _
  $region27: #{spectral_transform.7} parent=0 // pred_check_branch
    %205 = sbr.rel (0) target = $region29
  $region28: #{spectral_transform.7} parent=0 // pred_region
    _
  $region29: #{spectral_transform.7} parent=0 // pred_fallthru
    _
  // Predicated region
  $region30: #{spectral_transform.7} parent=0 // pred_check
    _
  $region31: #{spectral_transform.7} parent=0 // pred_check_branch
    %207 = sbr.rel (0) target = $region33
  $region32: #{spectral_transform.7} parent=0 // pred_region
    _
  $region33: #{spectral_transform.7} parent=0 // pred_fallthru
    _
  // Predicated region
  $region34: #{spectral_transform.7} parent=0 // pred_check
    _
  $region35: #{spectral_transform.7} parent=0 // pred_check_branch
    %209 = sbr.rel (0) target = $region37
  $region36: #{spectral_transform.7} parent=0 // pred_region
    _
  $region37: #{spectral_transform.7} parent=0 // pred_fallthru
    _

// kernel: spectral_transform.12
$region0: #{spectral_transform.12}
  #allocation0 [shape = 'u32[]', space=smem, size = 0x4, offset = 0x4, fixed_abs, tag = 'smem constant byte address 0x4 - core index']
  #allocation1 [shape = 'u32[144,128]{1,0:T(1,128)}', space=vmem, size = 0x12000, scoped, tag = 'internal scratch']
  %s0 = inlined_call_operand.vmem [shape: bf16[64,64], index: 0, kind: input, shape index: {}]
  %s1 = inlined_call_operand.vmem [shape: bf16[64,128], index: 1, kind: input, shape index: {}]
  %s2 = inlined_call_operand.vmem [shape: f32[64,1], index: 2, kind: input, shape index: {}]
  %s3 = inlined_call_operand.vmem [shape: f32[64,1], index: 3, kind: input, shape index: {}]
  %s4 = inlined_call_operand.vmem [shape: bf16[64,128], index: 4, kind: output, shape index: {}]
  %s5 = sld [smem:[#allocation0]]
  $region26: #{spectral_transform.12} parent=0
    _
  %s7 = ssub.s32 1, %s5
  %s8 = scalar_select 0, %s7, %s5
  // Predicated region
  $region2: #{spectral_transform.12} parent=0 // pred_check
    _
  $region3: #{spectral_transform.12} parent=0 // pred_check_branch
    %10 = sbr.rel (0) target = $region5
  $region4: #{spectral_transform.12} parent=0 // pred_region
    _
  $region5: #{spectral_transform.12} parent=0 // pred_fallthru
    _
  // Predicated region
  $region6: #{spectral_transform.12} parent=0 // pred_check
    _
  $region7: #{spectral_transform.12} parent=0 // pred_check_branch
    %12 = sbr.rel (0) target = $region9
  $region8: #{spectral_transform.12} parent=0 // pred_region
    _
  $region9: #{spectral_transform.12} parent=0 // pred_fallthru
    _
  // Predicated region
  $region10: #{spectral_transform.12} parent=0 // pred_check
    _
  $region11: #{spectral_transform.12} parent=0 // pred_check_branch
    %14 = sbr.rel (0) target = $region13
  $region12: #{spectral_transform.12} parent=0 // pred_region
    _
  $region13: #{spectral_transform.12} parent=0 // pred_fallthru
    _
  // Predicated region
  $region14: #{spectral_transform.12} parent=0 // pred_check
    _
  $region15: #{spectral_transform.12} parent=0 // pred_check_branch
    %16 = sbr.rel (0) target = $region17
  $region16: #{spectral_transform.12} parent=0 // pred_region
    _
  $region17: #{spectral_transform.12} parent=0 // pred_fallthru
    _
  %v18 = vld [vmem:[%s1] sm:$0xf]
  %v19 = vld [vmem:[%s1 + $0x4] sm:$0xf]
  %v20 = vld [vmem:[%s1 + $0x8] sm:$0xf]
  %v21 = vld [vmem:[%s1 + $0xc] sm:$0xf]
  %v22 = vld [vmem:[%s1 + $0x10] sm:$0xf]
  %v23 = vld [vmem:[%s1 + $0x14] sm:$0xf]
  %v24 = vld [vmem:[%s1 + $0x18] sm:$0xf]
  %v25 = vld [vmem:[%s1 + $0x1c] sm:$0xf]
  %v26 = vunpack.c.l.bf16 %v18
  %v27 = vunpack.c.l.bf16 %v19
  %v28 = vunpack.c.l.bf16 %v20
  %v29 = vunpack.c.l.bf16 %v21
  %v30 = vunpack.c.l.bf16 %v22
  %v31 = vunpack.c.l.bf16 %v23
  %v32 = vunpack.c.l.bf16 %v24
  %v33 = vunpack.c.l.bf16 %v25
  %v34 = vld [vmem:[%s2] sm:$0xff]
  %v35 = vld [vmem:[%s2 + $0x8] sm:$0xff]
  %v36 = vld [vmem:[%s2 + $0x10] sm:$0xff]
  %v37 = vld [vmem:[%s2 + $0x18] sm:$0xff]
  %v38 = vld [vmem:[%s2 + $0x20] sm:$0xff]
  %v39 = vld [vmem:[%s2 + $0x28] sm:$0xff]
  %v40 = vld [vmem:[%s2 + $0x30] sm:$0xff]
  %v41 = vld [vmem:[%s2 + $0x38] sm:$0xff]
  %43 = vset.pattern.permute.xlu0 0
  %44 = vperm.xlu0 %43, %v34
  %v45 = vpop.permute.xlu0 %44
  %48 = vset.pattern.permute.xlu0 0
  %49 = vperm.xlu0 %48, %v35
  %v50 = vpop.permute.xlu0 %49
  %53 = vset.pattern.permute.xlu0 0
  %54 = vperm.xlu0 %53, %v36
  %v55 = vpop.permute.xlu0 %54
  %58 = vset.pattern.permute.xlu0 0
  %59 = vperm.xlu0 %58, %v37
  %v60 = vpop.permute.xlu0 %59
  %63 = vset.pattern.permute.xlu0 0
  %64 = vperm.xlu0 %63, %v38
  %v65 = vpop.permute.xlu0 %64
  %68 = vset.pattern.permute.xlu0 0
  %69 = vperm.xlu0 %68, %v39
  %v70 = vpop.permute.xlu0 %69
  %73 = vset.pattern.permute.xlu0 0
  %74 = vperm.xlu0 %73, %v40
  %v75 = vpop.permute.xlu0 %74
  %78 = vset.pattern.permute.xlu0 0
  %79 = vperm.xlu0 %78, %v41
  %v80 = vpop.permute.xlu0 %79
  %v82 = vmul.f32 %v26, %v45
  %v83 = vmul.f32 %v27, %v50
  %v84 = vmul.f32 %v28, %v55
  %v85 = vmul.f32 %v29, %v60
  %v86 = vmul.f32 %v30, %v65
  %v87 = vmul.f32 %v31, %v70
  %v88 = vmul.f32 %v32, %v75
  %v89 = vmul.f32 %v33, %v80
  %v90 = vld [vmem:[%s3] sm:$0xff]
  %v91 = vld [vmem:[%s3 + $0x8] sm:$0xff]
  %v92 = vld [vmem:[%s3 + $0x10] sm:$0xff]
  %v93 = vld [vmem:[%s3 + $0x18] sm:$0xff]
  %v94 = vld [vmem:[%s3 + $0x20] sm:$0xff]
  %v95 = vld [vmem:[%s3 + $0x28] sm:$0xff]
  %v96 = vld [vmem:[%s3 + $0x30] sm:$0xff]
  %v97 = vld [vmem:[%s3 + $0x38] sm:$0xff]
  %99 = vset.pattern.permute.xlu0 0
  %100 = vperm.xlu0 %99, %v90
  %v101 = vpop.permute.xlu0 %100
  %104 = vset.pattern.permute.xlu0 0
  %105 = vperm.xlu0 %104, %v91
  %v106 = vpop.permute.xlu0 %105
  %109 = vset.pattern.permute.xlu0 0
  %110 = vperm.xlu0 %109, %v92
  %v111 = vpop.permute.xlu0 %110
  %114 = vset.pattern.permute.xlu0 0
  %115 = vperm.xlu0 %114, %v93
  %v116 = vpop.permute.xlu0 %115
  %119 = vset.pattern.permute.xlu0 0
  %120 = vperm.xlu0 %119, %v94
  %v121 = vpop.permute.xlu0 %120
  %124 = vset.pattern.permute.xlu0 0
  %125 = vperm.xlu0 %124, %v95
  %v126 = vpop.permute.xlu0 %125
  %129 = vset.pattern.permute.xlu0 0
  %130 = vperm.xlu0 %129, %v96
  %v131 = vpop.permute.xlu0 %130
  %134 = vset.pattern.permute.xlu0 0
  %135 = vperm.xlu0 %134, %v97
  %v136 = vpop.permute.xlu0 %135
  %v138 = vadd.f32 %v82, %v101
  %v139 = vadd.f32 %v83, %v106
  %v140 = vadd.f32 %v84, %v111
  %v141 = vadd.f32 %v85, %v116
  %v142 = vadd.f32 %v86, %v121
  %v143 = vadd.f32 %v87, %v126
  %v144 = vadd.f32 %v88, %v131
  %v145 = vadd.f32 %v89, %v136
  %v146 = vmax.f32 %v138, 0.0
  %v147 = vmax.f32 %v139, 0.0
  %v148 = vmax.f32 %v140, 0.0
  %v149 = vmax.f32 %v141, 0.0
  %v150 = vmax.f32 %v142, 0.0
  %v151 = vmax.f32 %v143, 0.0
  %v152 = vmax.f32 %v144, 0.0
  %v153 = vmax.f32 %v145, 0.0
  %v154 = vpack.c.bf16 %v147, %v146
  %v155 = vpack.c.bf16 %v149, %v148
  %v156 = vpack.c.bf16 %v151, %v150
  %v157 = vpack.c.bf16 %v153, %v152
  %v158 = vld [vmem:[%s0] sm:$0xf]
  %v159 = vld [vmem:[%s0 + $0x4] sm:$0xf]
  %v160 = vld [vmem:[%s0 + $0x8] sm:$0xf]
  %v161 = vld [vmem:[%s0 + $0xc] sm:$0xf]
  %v162 = vld [vmem:[%s0 + $0x10] sm:$0xf]
  %v163 = vld [vmem:[%s0 + $0x14] sm:$0xf]
  %v164 = vld [vmem:[%s0 + $0x18] sm:$0xf]
  %v165 = vld [vmem:[%s0 + $0x1c] sm:$0xf]
  %v174 = vunpack.c.l.b16 %v158
  %v175 = vunpack.c.l.b16 %v159
  %v176 = vunpack.c.l.b16 %v160
  %v177 = vunpack.c.l.b16 %v161
  %v178 = vunpack.c.l.b16 %v162
  %v179 = vunpack.c.l.b16 %v163
  %v180 = vunpack.c.l.b16 %v164
  %v181 = vunpack.c.l.b16 %v165
  %v182 = vpack.c.b16 %v175, %v174
  %v183 = vpack.c.b16 %v177, %v176
  %v184 = vpack.c.b16 %v179, %v178
  %v185 = vpack.c.b16 %v181, %v180
  %vm186 = vcmask 523264
  %v188 = vsel %vm186, %v182, 0
  %v191 = vsel %vm186, %v183, 0
  %v194 = vsel %vm186, %v184, 0
  %v197 = vsel %vm186, %v185, 0
  %199 = vmatprep.subr.bf16.mxu0 0
  %200 = vmatpush1.bf16.msra.mxu0 0
  %201 = vmatprep.subr.bf16.mxu0 0
  %202 = vmatpush1.bf16.msra.mxu0 0
  %203 = vmatprep.subr.bf16.mxu0 0
  %204 = vmatpush1.bf16.msra.mxu0 0
  %205 = vmatprep.subr.bf16.mxu0 0
  %206 = vmatpush1.bf16.msra.mxu0 0
  %207 = vmatprep.subr.bf16.mxu0 0
  %208 = vmatpush1.bf16.msra.mxu0 %v157
  %209 = vmatprep.subr.bf16.mxu0 0
  %210 = vmatpush1.bf16.msra.mxu0 %v156
  %211 = vmatprep.subr.bf16.mxu0 0
  %212 = vmatpush1.bf16.msra.mxu0 %v155
  %213 = vmatprep.subr.bf16.mxu0 0
  %214 = vmatpush1.bf16.msra.mxu0 %v154
  %215 = vmatprep.subr.bf16.mxu0 0
  %216 = vmatpush2.bf16.msra.mxu0 0
  %217 = vmatprep.subr.bf16.mxu0 0
  %218 = vmatpush2.bf16.msra.mxu0 0
  %219 = vmatprep.subr.bf16.mxu0 0
  %220 = vmatpush2.bf16.msra.mxu0 0
  %221 = vmatprep.subr.bf16.mxu0 0
  %222 = vmatpush2.bf16.msra.mxu0 0
  %223 = vmatprep.subr.bf16.mxu0 0
  %224 = vmatpush2.bf16.msra.mxu0 0
  %225 = vmatprep.subr.bf16.mxu0 0
  %226 = vmatpush2.bf16.msra.mxu0 0
  %227 = vmatprep.subr.bf16.mxu0 0
  %228 = vmatpush2.bf16.msra.mxu0 0
  %229 = vmatprep.subr.bf16.mxu0 0
  %230 = vmatpush2.bf16.msra.mxu0 0
  %231 = vmatprep.mubr.bf16.mxu0 0
  %232 = vmatmul.mubr.bf16.gmra.mxu0 %v188
  %v233 = vpop.f32.mrf.mxu0
  %v234 = vadd.f32 0.0, %v233
  %v235 = vpop.f32.mrf.mxu0
  %v236 = vpop.f32.mrf.mxu0
  %v237 = vadd.f32 0.0, %v236
  %v238 = vpop.f32.mrf.mxu0
  %239 = vmatprep.mubr.bf16.mxu0 0
  %240 = vmatmul.mubr.bf16.gmra.mxu0 %v191
  %v241 = vpop.f32.mrf.mxu0
  %v242 = vadd.f32 0.0, %v241
  %v243 = vpop.f32.mrf.mxu0
  %v244 = vpop.f32.mrf.mxu0
  %v245 = vadd.f32 0.0, %v244
  %v246 = vpop.f32.mrf.mxu0
  %247 = vmatprep.mubr.bf16.mxu0 0
  %248 = vmatmul.mubr.bf16.gmra.mxu0 %v194
  %v249 = vpop.f32.mrf.mxu0
  %v250 = vadd.f32 0.0, %v249
  %v251 = vpop.f32.mrf.mxu0
  %v252 = vpop.f32.mrf.mxu0
  %v253 = vadd.f32 0.0, %v252
  %v254 = vpop.f32.mrf.mxu0
  %255 = vmatprep.mubr.bf16.mxu0 0
  %256 = vmatmul.mubr.bf16.gmra.mxu0 %v197
  %v257 = vpop.f32.mrf.mxu0
  %v258 = vadd.f32 0.0, %v257
  %v259 = vpop.f32.mrf.mxu0
  %v260 = vpop.f32.mrf.mxu0
  %v261 = vadd.f32 0.0, %v260
  %v262 = vpop.f32.mrf.mxu0
  %263 = vdwg.mxu0
  %v264 = vpack.c.bf16 %v237, %v234
  %v265 = vpack.c.bf16 %v245, %v242
  %v266 = vpack.c.bf16 %v253, %v250
  %v267 = vpack.c.bf16 %v261, %v258
  %v272 = vunpack.c.l.b16 %v264
  %v273 = vunpack.c.h.b16 %v264
  %v274 = vunpack.c.l.b16 %v265
  %v275 = vunpack.c.h.b16 %v265
  %v276 = vunpack.c.l.b16 %v266
  %v277 = vunpack.c.h.b16 %v266
  %v278 = vunpack.c.l.b16 %v267
  %v279 = vunpack.c.h.b16 %v267
  %v280 = vpack.c.b16 %v272, %v272
  %v281 = vpack.c.b16 %v273, %v273
  %v282 = vpack.c.b16 %v274, %v274
  %v283 = vpack.c.b16 %v275, %v275
  %v284 = vpack.c.b16 %v276, %v276
  %v285 = vpack.c.b16 %v277, %v277
  %v286 = vpack.c.b16 %v278, %v278
  %v287 = vpack.c.b16 %v279, %v279
  %296 = vst [vmem:[%s4] sm:$0xf] %v280
  %297 = vst [vmem:[%s4 + $0x4] sm:$0xf] %v281
  %298 = vst [vmem:[%s4 + $0x8] sm:$0xf] %v282
  %299 = vst [vmem:[%s4 + $0xc] sm:$0xf] %v283
  %300 = vst [vmem:[%s4 + $0x10] sm:$0xf] %v284
  %301 = vst [vmem:[%s4 + $0x14] sm:$0xf] %v285
  %302 = vst [vmem:[%s4 + $0x18] sm:$0xf] %v286
  %303 = vst [vmem:[%s4 + $0x1c] sm:$0xf] %v287
  // Predicated region
  $region18: #{spectral_transform.12} parent=0 // pred_check
    _
  $region19: #{spectral_transform.12} parent=0 // pred_check_branch
    %305 = sbr.rel (0) target = $region21
  $region20: #{spectral_transform.12} parent=0 // pred_region
    _
  $region21: #{spectral_transform.12} parent=0 // pred_fallthru
    _
  // Predicated region
  $region22: #{spectral_transform.12} parent=0 // pred_check
    _
  $region23: #{spectral_transform.12} parent=0 // pred_check_branch
    %307 = sbr.rel (0) target = $region25
  $region24: #{spectral_transform.12} parent=0 // pred_region
    _
  $region25: #{spectral_transform.12} parent=0 // pred_fallthru
    _

// kernel: spectral_transform.11
$region0: #{spectral_transform.11}
  #allocation0 [shape = 'u32[]', space=smem, size = 0x4, offset = 0x4, fixed_abs, tag = 'smem constant byte address 0x4 - core index']
  #allocation1 [shape = 'u32[144,128]{1,0:T(1,128)}', space=vmem, size = 0x12000, scoped, tag = 'internal scratch']
  %s0 = inlined_call_operand.vmem [shape: bf16[64,32], index: 0, kind: input, shape index: {}]
  %s1 = inlined_call_operand.vmem [shape: bf16[32,128], index: 1, kind: input, shape index: {}]
  %s2 = inlined_call_operand.vmem [shape: bf16[64,128], index: 2, kind: output, shape index: {0}]
  %s3 = inlined_call_operand.vmem [shape: f32[64,1], index: 3, kind: output, shape index: {1}]
  %s4 = inlined_call_operand.vmem [shape: f32[64,1], index: 4, kind: output, shape index: {2}]
  %5 = xla_tuple %s2, %s3, %s4
  %s6 = sld [smem:[#allocation0]]
  $region38: #{spectral_transform.11} parent=0
    _
  %s8 = ssub.s32 1, %s6
  %s9 = scalar_select 0, %s8, %s6
  // Predicated region
  $region2: #{spectral_transform.11} parent=0 // pred_check
    _
  $region3: #{spectral_transform.11} parent=0 // pred_check_branch
    %11 = sbr.rel (0) target = $region5
  $region4: #{spectral_transform.11} parent=0 // pred_region
    _
  $region5: #{spectral_transform.11} parent=0 // pred_fallthru
    _
  // Predicated region
  $region6: #{spectral_transform.11} parent=0 // pred_check
    _
  $region7: #{spectral_transform.11} parent=0 // pred_check_branch
    %13 = sbr.rel (0) target = $region9
  $region8: #{spectral_transform.11} parent=0 // pred_region
    _
  $region9: #{spectral_transform.11} parent=0 // pred_fallthru
    _
  %v15 = vld [vmem:[%s0] sm:$0xf]
  %v16 = vld [vmem:[%s0 + $0x4] sm:$0xf]
  %v17 = vld [vmem:[%s0 + $0x8] sm:$0xf]
  %v18 = vld [vmem:[%s0 + $0xc] sm:$0xf]
  %v19 = vld [vmem:[%s0 + $0x10] sm:$0xf]
  %v20 = vld [vmem:[%s0 + $0x14] sm:$0xf]
  %v21 = vld [vmem:[%s0 + $0x18] sm:$0xf]
  %v22 = vld [vmem:[%s0 + $0x1c] sm:$0xf]
  %v23 = vld [vmem:[%s1] sm:$0xf]
  %v24 = vld [vmem:[%s1 + $0x4] sm:$0xf]
  %v25 = vld [vmem:[%s1 + $0x8] sm:$0xf]
  %v26 = vld [vmem:[%s1 + $0xc] sm:$0xf]
  %v35 = vunpack.c.l.b16 %v15
  %v36 = vunpack.c.l.b16 %v16
  %v37 = vunpack.c.l.b16 %v17
  %v38 = vunpack.c.l.b16 %v18
  %v39 = vunpack.c.l.b16 %v19
  %v40 = vunpack.c.l.b16 %v20
  %v41 = vunpack.c.l.b16 %v21
  %v42 = vunpack.c.l.b16 %v22
  %v43 = vpack.c.b16 %v36, %v35
  %v44 = vpack.c.b16 %v38, %v37
  %v45 = vpack.c.b16 %v40, %v39
  %v46 = vpack.c.b16 %v42, %v41
  %v51 = vunpack.c.l.b16 %v23
  %v52 = vunpack.c.l.b16 %v24
  %v53 = vunpack.c.l.b16 %v25
  %v54 = vunpack.c.l.b16 %v26
  %v55 = vpack.c.b16 %v52, %v51
  %v56 = vpack.c.b16 %v54, %v53
  %vm59 = vcmask 261120
  %v61 = vsel %vm59, %v43, 0
  %v64 = vsel %vm59, %v44, 0
  %v67 = vsel %vm59, %v45, 0
  %v70 = vsel %vm59, %v46, 0
  %72 = vmatprep.subr.bf16.mxu0 0
  %73 = vmatpush1.bf16.msra.mxu0 0
  %74 = vmatprep.subr.bf16.mxu0 0
  %75 = vmatpush1.bf16.msra.mxu0 0
  %76 = vmatprep.subr.bf16.mxu0 0
  %77 = vmatpush1.bf16.msra.mxu0 0
  %78 = vmatprep.subr.bf16.mxu0 0
  %79 = vmatpush1.bf16.msra.mxu0 0
  %80 = vmatprep.subr.bf16.mxu0 0
  %81 = vmatpush1.bf16.msra.mxu0 0
  %82 = vmatprep.subr.bf16.mxu0 0
  %83 = vmatpush1.bf16.msra.mxu0 0
  %84 = vmatprep.subr.bf16.mxu0 0
  %85 = vmatpush1.bf16.msra.mxu0 %v56
  %86 = vmatprep.subr.bf16.mxu0 0
  %87 = vmatpush1.bf16.msra.mxu0 %v55
  %88 = vmatprep.subr.bf16.mxu0 0
  %89 = vmatpush2.bf16.msra.mxu0 0
  %90 = vmatprep.subr.bf16.mxu0 0
  %91 = vmatpush2.bf16.msra.mxu0 0
  %92 = vmatprep.subr.bf16.mxu0 0
  %93 = vmatpush2.bf16.msra.mxu0 0
  %94 = vmatprep.subr.bf16.mxu0 0
  %95 = vmatpush2.bf16.msra.mxu0 0
  %96 = vmatprep.subr.bf16.mxu0 0
  %97 = vmatpush2.bf16.msra.mxu0 0
  %98 = vmatprep.subr.bf16.mxu0 0
  %99 = vmatpush2.bf16.msra.mxu0 0
  %100 = vmatprep.subr.bf16.mxu0 0
  %101 = vmatpush2.bf16.msra.mxu0 0
  %102 = vmatprep.subr.bf16.mxu0 0
  %103 = vmatpush2.bf16.msra.mxu0 0
  %104 = vmatprep.mubr.bf16.mxu0 0
  %105 = vmatmul.mubr.bf16.gmra.mxu0 %v61
  %v106 = vpop.f32.mrf.mxu0
  %v107 = vadd.f32 0.0, %v106
  %v108 = vpop.f32.mrf.mxu0
  %v109 = vpop.f32.mrf.mxu0
  %v110 = vadd.f32 0.0, %v109
  %v111 = vpop.f32.mrf.mxu0
  %112 = vmatprep.mubr.bf16.mxu0 0
  %113 = vmatmul.mubr.bf16.gmra.mxu0 %v64
  %v114 = vpop.f32.mrf.mxu0
  %v115 = vadd.f32 0.0, %v114
  %v116 = vpop.f32.mrf.mxu0
  %v117 = vpop.f32.mrf.mxu0
  %v118 = vadd.f32 0.0, %v117
  %v119 = vpop.f32.mrf.mxu0
  %120 = vmatprep.mubr.bf16.mxu0 0
  %121 = vmatmul.mubr.bf16.gmra.mxu0 %v67
  %v122 = vpop.f32.mrf.mxu0
  %v123 = vadd.f32 0.0, %v122
  %v124 = vpop.f32.mrf.mxu0
  %v125 = vpop.f32.mrf.mxu0
  %v126 = vadd.f32 0.0, %v125
  %v127 = vpop.f32.mrf.mxu0
  %128 = vmatprep.mubr.bf16.mxu0 0
  %129 = vmatmul.mubr.bf16.gmra.mxu0 %v70
  %v130 = vpop.f32.mrf.mxu0
  %v131 = vadd.f32 0.0, %v130
  %v132 = vpop.f32.mrf.mxu0
  %v133 = vpop.f32.mrf.mxu0
  %v134 = vadd.f32 0.0, %v133
  %v135 = vpop.f32.mrf.mxu0
  %136 = vdwg.mxu0
  %v137 = vpack.c.bf16 %v110, %v107
  %v138 = vpack.c.bf16 %v118, %v115
  %v139 = vpack.c.bf16 %v126, %v123
  %v140 = vpack.c.bf16 %v134, %v131
  %v145 = vunpack.c.l.b16 %v137
  %v146 = vunpack.c.h.b16 %v137
  %v147 = vunpack.c.l.b16 %v138
  %v148 = vunpack.c.h.b16 %v138
  %v149 = vunpack.c.l.b16 %v139
  %v150 = vunpack.c.h.b16 %v139
  %v151 = vunpack.c.l.b16 %v140
  %v152 = vunpack.c.h.b16 %v140
  %v153 = vpack.c.b16 %v145, %v145
  %v154 = vpack.c.b16 %v146, %v146
  %v155 = vpack.c.b16 %v147, %v147
  %v156 = vpack.c.b16 %v148, %v148
  %v157 = vpack.c.b16 %v149, %v149
  %v158 = vpack.c.b16 %v150, %v150
  %v159 = vpack.c.b16 %v151, %v151
  %v160 = vpack.c.b16 %v152, %v152
  %169 = vst [vmem:[%s2] sm:$0xf] %v153
  %170 = vst [vmem:[%s2 + $0x4] sm:$0xf] %v154
  %171 = vst [vmem:[%s2 + $0x8] sm:$0xf] %v155
  %172 = vst [vmem:[%s2 + $0xc] sm:$0xf] %v156
  %173 = vst [vmem:[%s2 + $0x10] sm:$0xf] %v157
  %174 = vst [vmem:[%s2 + $0x14] sm:$0xf] %v158
  %175 = vst [vmem:[%s2 + $0x18] sm:$0xf] %v159
  %176 = vst [vmem:[%s2 + $0x1c] sm:$0xf] %v160
  %p177 = scmp.eq.s32.totalorder 0, 0
  // Predicated region
  $region10: #{spectral_transform.11} parent=0 // pred_check
    %p178 = pneg %p177
  $region11: #{spectral_transform.11} parent=0 // pred_check_branch
    %180 = sbr.rel (%p178) target = $region13
  $region12: #{spectral_transform.11} parent=0 // pred_region
    %vm181 = vcmask 7168
    %182 = vst.msk [vmem:[%s3] sm:$0xff] %vm181, 0.0
    %183 = vst.msk [vmem:[%s3 + $0x8] sm:$0xff] %vm181, 0.0
    %184 = vst.msk [vmem:[%s3 + $0x10] sm:$0xff] %vm181, 0.0
    %185 = vst.msk [vmem:[%s3 + $0x18] sm:$0xff] %vm181, 0.0
    %186 = vst.msk [vmem:[%s3 + $0x20] sm:$0xff] %vm181, 0.0
    %187 = vst.msk [vmem:[%s3 + $0x28] sm:$0xff] %vm181, 0.0
    %188 = vst.msk [vmem:[%s3 + $0x30] sm:$0xff] %vm181, 0.0
    %189 = vst.msk [vmem:[%s3 + $0x38] sm:$0xff] %vm181, 0.0
    %190 = vst.msk [vmem:[%s4] sm:$0xff] %vm181, 0.0
    %191 = vst.msk [vmem:[%s4 + $0x8] sm:$0xff] %vm181, 0.0
    %192 = vst.msk [vmem:[%s4 + $0x10] sm:$0xff] %vm181, 0.0
    %193 = vst.msk [vmem:[%s4 + $0x18] sm:$0xff] %vm181, 0.0
    %194 = vst.msk [vmem:[%s4 + $0x20] sm:$0xff] %vm181, 0.0
    %195 = vst.msk [vmem:[%s4 + $0x28] sm:$0xff] %vm181, 0.0
    %196 = vst.msk [vmem:[%s4 + $0x30] sm:$0xff] %vm181, 0.0
    %197 = vst.msk [vmem:[%s4 + $0x38] sm:$0xff] %vm181, 0.0
  $region13: #{spectral_transform.11} parent=0 // pred_fallthru
    _
  %v198 = vld [vmem:[%s3] sm:$0xff]
  %v199 = vld [vmem:[%s3 + $0x8] sm:$0xff]
  %v200 = vld [vmem:[%s3 + $0x10] sm:$0xff]
  %v201 = vld [vmem:[%s3 + $0x18] sm:$0xff]
  %v202 = vld [vmem:[%s3 + $0x20] sm:$0xff]
  %v203 = vld [vmem:[%s3 + $0x28] sm:$0xff]
  %v204 = vld [vmem:[%s3 + $0x30] sm:$0xff]
  %v205 = vld [vmem:[%s3 + $0x38] sm:$0xff]
  %206 = vadd.xlane.f32.xlu0 %v107
  %v207 = vpop.xlane.xlu0 %206
  %208 = vadd.xlane.f32.xlu0 %v110
  %v209 = vpop.xlane.xlu0 %208
  %210 = vadd.xlane.f32.xlu0 %v115
  %v211 = vpop.xlane.xlu0 %210
  %212 = vadd.xlane.f32.xlu0 %v118
  %v213 = vpop.xlane.xlu0 %212
  %214 = vadd.xlane.f32.xlu0 %v123
  %v215 = vpop.xlane.xlu0 %214
  %216 = vadd.xlane.f32.xlu0 %v126
  %v217 = vpop.xlane.xlu0 %216
  %218 = vadd.xlane.f32.xlu0 %v131
  %v219 = vpop.xlane.xlu0 %218
  %220 = vadd.xlane.f32.xlu0 %v134
  %v221 = vpop.xlane.xlu0 %220
  %v222 = vadd.f32 %v198, %v207
  %v223 = vadd.f32 %v199, %v209
  %v224 = vadd.f32 %v200, %v211
  %v225 = vadd.f32 %v201, %v213
  %v226 = vadd.f32 %v202, %v215
  %v227 = vadd.f32 %v203, %v217
  %v228 = vadd.f32 %v204, %v219
  %v229 = vadd.f32 %v205, %v221
  %vm230 = vcmask 7168
  %231 = vst.msk [vmem:[%s3] sm:$0xff] %vm230, %v222
  %232 = vst.msk [vmem:[%s3 + $0x8] sm:$0xff] %vm230, %v223
  %233 = vst.msk [vmem:[%s3 + $0x10] sm:$0xff] %vm230, %v224
  %234 = vst.msk [vmem:[%s3 + $0x18] sm:$0xff] %vm230, %v225
  %235 = vst.msk [vmem:[%s3 + $0x20] sm:$0xff] %vm230, %v226
  %236 = vst.msk [vmem:[%s3 + $0x28] sm:$0xff] %vm230, %v227
  %237 = vst.msk [vmem:[%s3 + $0x30] sm:$0xff] %vm230, %v228
  %238 = vst.msk [vmem:[%s3 + $0x38] sm:$0xff] %vm230, %v229
  %v239 = vld [vmem:[%s4] sm:$0xff]
  %v240 = vld [vmem:[%s4 + $0x8] sm:$0xff]
  %v241 = vld [vmem:[%s4 + $0x10] sm:$0xff]
  %v242 = vld [vmem:[%s4 + $0x18] sm:$0xff]
  %v243 = vld [vmem:[%s4 + $0x20] sm:$0xff]
  %v244 = vld [vmem:[%s4 + $0x28] sm:$0xff]
  %v245 = vld [vmem:[%s4 + $0x30] sm:$0xff]
  %v246 = vld [vmem:[%s4 + $0x38] sm:$0xff]
  %v247 = vmul.f32 %v107, %v107
  %v248 = vmul.f32 %v110, %v110
  %v249 = vmul.f32 %v115, %v115
  %v250 = vmul.f32 %v118, %v118
  %v251 = vmul.f32 %v123, %v123
  %v252 = vmul.f32 %v126, %v126
  %v253 = vmul.f32 %v131, %v131
  %v254 = vmul.f32 %v134, %v134
  %255 = vadd.xlane.f32.xlu0 %v247
  %v256 = vpop.xlane.xlu0 %255
  %257 = vadd.xlane.f32.xlu0 %v248
  %v258 = vpop.xlane.xlu0 %257
  %259 = vadd.xlane.f32.xlu0 %v249
  %v260 = vpop.xlane.xlu0 %259
  %261 = vadd.xlane.f32.xlu0 %v250
  %v262 = vpop.xlane.xlu0 %261
  %263 = vadd.xlane.f32.xlu0 %v251
  %v264 = vpop.xlane.xlu0 %263
  %265 = vadd.xlane.f32.xlu0 %v252
  %v266 = vpop.xlane.xlu0 %265
  %267 = vadd.xlane.f32.xlu0 %v253
  %v268 = vpop.xlane.xlu0 %267
  %269 = vadd.xlane.f32.xlu0 %v254
  %v270 = vpop.xlane.xlu0 %269
  %v271 = vadd.f32 %v239, %v256
  %v272 = vadd.f32 %v240, %v258
  %v273 = vadd.f32 %v241, %v260
  %v274 = vadd.f32 %v242, %v262
  %v275 = vadd.f32 %v243, %v264
  %v276 = vadd.f32 %v244, %v266
  %v277 = vadd.f32 %v245, %v268
  %v278 = vadd.f32 %v246, %v270
  %279 = vst.msk [vmem:[%s4] sm:$0xff] %vm230, %v271
  %280 = vst.msk [vmem:[%s4 + $0x8] sm:$0xff] %vm230, %v272
  %281 = vst.msk [vmem:[%s4 + $0x10] sm:$0xff] %vm230, %v273
  %282 = vst.msk [vmem:[%s4 + $0x18] sm:$0xff] %vm230, %v274
  %283 = vst.msk [vmem:[%s4 + $0x20] sm:$0xff] %vm230, %v275
  %284 = vst.msk [vmem:[%s4 + $0x28] sm:$0xff] %vm230, %v276
  %285 = vst.msk [vmem:[%s4 + $0x30] sm:$0xff] %vm230, %v277
  %286 = vst.msk [vmem:[%s4 + $0x38] sm:$0xff] %vm230, %v278
  // Predicated region
  $region14: #{spectral_transform.11} parent=0 // pred_check
    _
  $region15: #{spectral_transform.11} parent=0 // pred_check_branch
    %288 = sbr.rel (0) target = $region17
  $region16: #{spectral_transform.11} parent=0 // pred_region
    _
  $region17: #{spectral_transform.11} parent=0 // pred_fallthru
    _
  // Predicated region
  $region18: #{spectral_transform.11} parent=0 // pred_check
    _
  $region19: #{spectral_transform.11} parent=0 // pred_check_branch
    %290 = sbr.rel (0) target = $region21
  $region20: #{spectral_transform.11} parent=0 // pred_region
    _
  $region21: #{spectral_transform.11} parent=0 // pred_fallthru
    _
  // Predicated region
  $region22: #{spectral_transform.11} parent=0 // pred_check
    _
  $region23: #{spectral_transform.11} parent=0 // pred_check_branch
    %292 = sbr.rel (0) target = $region25
  $region24: #{spectral_transform.11} parent=0 // pred_region
    _
  $region25: #{spectral_transform.11} parent=0 // pred_fallthru
    _
  // Predicated region
  $region26: #{spectral_transform.11} parent=0 // pred_check
    _
  $region27: #{spectral_transform.11} parent=0 // pred_check_branch
    %294 = sbr.rel (0) target = $region29
  $region28: #{spectral_transform.11} parent=0 // pred_region
    _
  $region29: #{spectral_transform.11} parent=0 // pred_fallthru
    _
  // Predicated region
  $region30: #{spectral_transform.11} parent=0 // pred_check
    _
  $region31: #{spectral_transform.11} parent=0 // pred_check_branch
    %296 = sbr.rel (0) target = $region33
  $region32: #{spectral_transform.11} parent=0 // pred_region
    _
  $region33: #{spectral_transform.11} parent=0 // pred_fallthru
    _
  // Predicated region
  $region34: #{spectral_transform.11} parent=0 // pred_check
    _
  $region35: #{spectral_transform.11} parent=0 // pred_check_branch
    %298 = sbr.rel (0) target = $region37
  $region36: #{spectral_transform.11} parent=0 // pred_region
    _
  $region37: #{spectral_transform.11} parent=0 // pred_fallthru
    _

// kernel: spectral_transform.9
$region0: #{spectral_transform.9}
  #allocation0 [shape = 'u32[]', space=smem, size = 0x4, offset = 0x4, fixed_abs, tag = 'smem constant byte address 0x4 - core index']
  #allocation1 [shape = 'u32[144,128]{1,0:T(1,128)}', space=vmem, size = 0x12000, scoped, tag = 'internal scratch']
  %s0 = inlined_call_operand.vmem [shape: bf16[128,64], index: 0, kind: input, shape index: {}]
  %s1 = inlined_call_operand.vmem [shape: bf16[64,128], index: 1, kind: input, shape index: {}]
  %s2 = inlined_call_operand.vmem [shape: bf16[128,128], index: 2, kind: output, shape index: {0}]
  %s3 = inlined_call_operand.vmem [shape: f32[128,1], index: 3, kind: output, shape index: {1}]
  %s4 = inlined_call_operand.vmem [shape: f32[128,1], index: 4, kind: output, shape index: {2}]
  %5 = xla_tuple %s2, %s3, %s4
  %s6 = sld [smem:[#allocation0]]
  $region38: #{spectral_transform.9} parent=0
    _
  %s8 = ssub.s32 1, %s6
  %s9 = scalar_select 0, %s8, %s6
  // Predicated region
  $region2: #{spectral_transform.9} parent=0 // pred_check
    _
  $region3: #{spectral_transform.9} parent=0 // pred_check_branch
    %11 = sbr.rel (0) target = $region5
  $region4: #{spectral_transform.9} parent=0 // pred_region
    _
  $region5: #{spectral_transform.9} parent=0 // pred_fallthru
    _
  // Predicated region
  $region6: #{spectral_transform.9} parent=0 // pred_check
    _
  $region7: #{spectral_transform.9} parent=0 // pred_check_branch
    %13 = sbr.rel (0) target = $region9
  $region8: #{spectral_transform.9} parent=0 // pred_region
    _
  $region9: #{spectral_transform.9} parent=0 // pred_fallthru
    _
  %v15 = vld [vmem:[%s0] sm:$0xf]
  %v16 = vld [vmem:[%s0 + $0x4] sm:$0xf]
  %v17 = vld [vmem:[%s0 + $0x8] sm:$0xf]
  %v18 = vld [vmem:[%s0 + $0xc] sm:$0xf]
  %v19 = vld [vmem:[%s0 + $0x10] sm:$0xf]
  %v20 = vld [vmem:[%s0 + $0x14] sm:$0xf]
  %v21 = vld [vmem:[%s0 + $0x18] sm:$0xf]
  %v22 = vld [vmem:[%s0 + $0x1c] sm:$0xf]
  %v23 = vld [vmem:[%s0 + $0x20] sm:$0xf]
  %v24 = vld [vmem:[%s0 + $0x24] sm:$0xf]
  %v25 = vld [vmem:[%s0 + $0x28] sm:$0xf]
  %v26 = vld [vmem:[%s0 + $0x2c] sm:$0xf]
  %v27 = vld [vmem:[%s0 + $0x30] sm:$0xf]
  %v28 = vld [vmem:[%s0 + $0x34] sm:$0xf]
  %v29 = vld [vmem:[%s0 + $0x38] sm:$0xf]
  %v30 = vld [vmem:[%s0 + $0x3c] sm:$0xf]
  %v31 = vld [vmem:[%s1] sm:$0xf]
  %v32 = vld [vmem:[%s1 + $0x4] sm:$0xf]
  %v33 = vld [vmem:[%s1 + $0x8] sm:$0xf]
  %v34 = vld [vmem:[%s1 + $0xc] sm:$0xf]
  %v35 = vld [vmem:[%s1 + $0x10] sm:$0xf]
  %v36 = vld [vmem:[%s1 + $0x14] sm:$0xf]
  %v37 = vld [vmem:[%s1 + $0x18] sm:$0xf]
  %v38 = vld [vmem:[%s1 + $0x1c] sm:$0xf]
  %v55 = vunpack.c.l.b16 %v15
  %v56 = vunpack.c.l.b16 %v16
  %v57 = vunpack.c.l.b16 %v17
  %v58 = vunpack.c.l.b16 %v18
  %v59 = vunpack.c.l.b16 %v19
  %v60 = vunpack.c.l.b16 %v20
  %v61 = vunpack.c.l.b16 %v21
  %v62 = vunpack.c.l.b16 %v22
  %v63 = vunpack.c.l.b16 %v23
  %v64 = vunpack.c.l.b16 %v24
  %v65 = vunpack.c.l.b16 %v25
  %v66 = vunpack.c.l.b16 %v26
  %v67 = vunpack.c.l.b16 %v27
  %v68 = vunpack.c.l.b16 %v28
  %v69 = vunpack.c.l.b16 %v29
  %v70 = vunpack.c.l.b16 %v30
  %v71 = vpack.c.b16 %v56, %v55
  %v72 = vpack.c.b16 %v58, %v57
  %v73 = vpack.c.b16 %v60, %v59
  %v74 = vpack.c.b16 %v62, %v61
  %v75 = vpack.c.b16 %v64, %v63
  %v76 = vpack.c.b16 %v66, %v65
  %v77 = vpack.c.b16 %v68, %v67
  %v78 = vpack.c.b16 %v70, %v69
  %v87 = vunpack.c.l.b16 %v31
  %v88 = vunpack.c.l.b16 %v32
  %v89 = vunpack.c.l.b16 %v33
  %v90 = vunpack.c.l.b16 %v34
  %v91 = vunpack.c.l.b16 %v35
  %v92 = vunpack.c.l.b16 %v36
  %v93 = vunpack.c.l.b16 %v37
  %v94 = vunpack.c.l.b16 %v38
  %v95 = vpack.c.b16 %v88, %v87
  %v96 = vpack.c.b16 %v90, %v89
  %v97 = vpack.c.b16 %v92, %v91
  %v98 = vpack.c.b16 %v94, %v93
  %vm103 = vcmask 523264
  %v105 = vsel %vm103, %v71, 0
  %v108 = vsel %vm103, %v72, 0
  %v111 = vsel %vm103, %v73, 0
  %v114 = vsel %vm103, %v74, 0
  %v117 = vsel %vm103, %v75, 0
  %v120 = vsel %vm103, %v76, 0
  %v123 = vsel %vm103, %v77, 0
  %v126 = vsel %vm103, %v78, 0
  %128 = vmatprep.subr.bf16.mxu0 0
  %129 = vmatpush1.bf16.msra.mxu0 0
  %130 = vmatprep.subr.bf16.mxu0 0
  %131 = vmatpush1.bf16.msra.mxu0 0
  %132 = vmatprep.subr.bf16.mxu0 0
  %133 = vmatpush1.bf16.msra.mxu0 0
  %134 = vmatprep.subr.bf16.mxu0 0
  %135 = vmatpush1.bf16.msra.mxu0 0
  %136 = vmatprep.subr.bf16.mxu0 0
  %137 = vmatpush1.bf16.msra.mxu0 %v98
  %138 = vmatprep.subr.bf16.mxu0 0
  %139 = vmatpush1.bf16.msra.mxu0 %v97
  %140 = vmatprep.subr.bf16.mxu0 0
  %141 = vmatpush1.bf16.msra.mxu0 %v96
  %142 = vmatprep.subr.bf16.mxu0 0
  %143 = vmatpush1.bf16.msra.mxu0 %v95
  %144 = vmatprep.subr.bf16.mxu0 0
  %145 = vmatpush2.bf16.msra.mxu0 0
  %146 = vmatprep.subr.bf16.mxu0 0
  %147 = vmatpush2.bf16.msra.mxu0 0
  %148 = vmatprep.subr.bf16.mxu0 0
  %149 = vmatpush2.bf16.msra.mxu0 0
  %150 = vmatprep.subr.bf16.mxu0 0
  %151 = vmatpush2.bf16.msra.mxu0 0
  %152 = vmatprep.subr.bf16.mxu0 0
  %153 = vmatpush2.bf16.msra.mxu0 0
  %154 = vmatprep.subr.bf16.mxu0 0
  %155 = vmatpush2.bf16.msra.mxu0 0
  %156 = vmatprep.subr.bf16.mxu0 0
  %157 = vmatpush2.bf16.msra.mxu0 0
  %158 = vmatprep.subr.bf16.mxu0 0
  %159 = vmatpush2.bf16.msra.mxu0 0
  %160 = vmatprep.mubr.bf16.mxu0 0
  %161 = vmatmul.mubr.bf16.gmra.mxu0 %v105
  %v162 = vpop.f32.mrf.mxu0
  %v163 = vadd.f32 0.0, %v162
  %v164 = vpop.f32.mrf.mxu0
  %v165 = vpop.f32.mrf.mxu0
  %v166 = vadd.f32 0.0, %v165
  %v167 = vpop.f32.mrf.mxu0
  %168 = vmatprep.mubr.bf16.mxu0 0
  %169 = vmatmul.mubr.bf16.gmra.mxu0 %v108
  %v170 = vpop.f32.mrf.mxu0
  %v171 = vadd.f32 0.0, %v170
  %v172 = vpop.f32.mrf.mxu0
  %v173 = vpop.f32.mrf.mxu0
  %v174 = vadd.f32 0.0, %v173
  %v175 = vpop.f32.mrf.mxu0
  %176 = vmatprep.mubr.bf16.mxu0 0
  %177 = vmatmul.mubr.bf16.gmra.mxu0 %v111
  %v178 = vpop.f32.mrf.mxu0
  %v179 = vadd.f32 0.0, %v178
  %v180 = vpop.f32.mrf.mxu0
  %v181 = vpop.f32.mrf.mxu0
  %v182 = vadd.f32 0.0, %v181
  %v183 = vpop.f32.mrf.mxu0
  %184 = vmatprep.mubr.bf16.mxu0 0
  %185 = vmatmul.mubr.bf16.gmra.mxu0 %v114
  %v186 = vpop.f32.mrf.mxu0
  %v187 = vadd.f32 0.0, %v186
  %v188 = vpop.f32.mrf.mxu0
  %v189 = vpop.f32.mrf.mxu0
  %v190 = vadd.f32 0.0, %v189
  %v191 = vpop.f32.mrf.mxu0
  %192 = vmatprep.mubr.bf16.mxu0 0
  %193 = vmatmul.mubr.bf16.gmra.mxu0 %v117
  %v194 = vpop.f32.mrf.mxu0
  %v195 = vadd.f32 0.0, %v194
  %v196 = vpop.f32.mrf.mxu0
  %v197 = vpop.f32.mrf.mxu0
  %v198 = vadd.f32 0.0, %v197
  %v199 = vpop.f32.mrf.mxu0
  %200 = vmatprep.mubr.bf16.mxu0 0
  %201 = vmatmul.mubr.bf16.gmra.mxu0 %v120
  %v202 = vpop.f32.mrf.mxu0
  %v203 = vadd.f32 0.0, %v202
  %v204 = vpop.f32.mrf.mxu0
  %v205 = vpop.f32.mrf.mxu0
  %v206 = vadd.f32 0.0, %v205
  %v207 = vpop.f32.mrf.mxu0
  %208 = vmatprep.mubr.bf16.mxu0 0
  %209 = vmatmul.mubr.bf16.gmra.mxu0 %v123
  %v210 = vpop.f32.mrf.mxu0
  %v211 = vadd.f32 0.0, %v210
  %v212 = vpop.f32.mrf.mxu0
  %v213 = vpop.f32.mrf.mxu0
  %v214 = vadd.f32 0.0, %v213
  %v215 = vpop.f32.mrf.mxu0
  %216 = vmatprep.mubr.bf16.mxu0 0
  %217 = vmatmul.mubr.bf16.gmra.mxu0 %v126
  %v218 = vpop.f32.mrf.mxu0
  %v219 = vadd.f32 0.0, %v218
  %v220 = vpop.f32.mrf.mxu0
  %v221 = vpop.f32.mrf.mxu0
  %v222 = vadd.f32 0.0, %v221
  %v223 = vpop.f32.mrf.mxu0
  %224 = vdwg.mxu0
  %v225 = vpack.c.bf16 %v166, %v163
  %v226 = vpack.c.bf16 %v174, %v171
  %v227 = vpack.c.bf16 %v182, %v179
  %v228 = vpack.c.bf16 %v190, %v187
  %v229 = vpack.c.bf16 %v198, %v195
  %v230 = vpack.c.bf16 %v206, %v203
  %v231 = vpack.c.bf16 %v214, %v211
  %v232 = vpack.c.bf16 %v222, %v219
  %v241 = vunpack.c.l.b16 %v225
  %v242 = vunpack.c.h.b16 %v225
  %v243 = vunpack.c.l.b16 %v226
  %v244 = vunpack.c.h.b16 %v226
  %v245 = vunpack.c.l.b16 %v227
  %v246 = vunpack.c.h.b16 %v227
  %v247 = vunpack.c.l.b16 %v228
  %v248 = vunpack.c.h.b16 %v228
  %v249 = vunpack.c.l.b16 %v229
  %v250 = vunpack.c.h.b16 %v229
  %v251 = vunpack.c.l.b16 %v230
  %v252 = vunpack.c.h.b16 %v230
  %v253 = vunpack.c.l.b16 %v231
  %v254 = vunpack.c.h.b16 %v231
  %v255 = vunpack.c.l.b16 %v232
  %v256 = vunpack.c.h.b16 %v232
  %v257 = vpack.c.b16 %v241, %v241
  %v258 = vpack.c.b16 %v242, %v242
  %v259 = vpack.c.b16 %v243, %v243
  %v260 = vpack.c.b16 %v244, %v244
  %v261 = vpack.c.b16 %v245, %v245
  %v262 = vpack.c.b16 %v246, %v246
  %v263 = vpack.c.b16 %v247, %v247
  %v264 = vpack.c.b16 %v248, %v248
  %v265 = vpack.c.b16 %v249, %v249
  %v266 = vpack.c.b16 %v250, %v250
  %v267 = vpack.c.b16 %v251, %v251
  %v268 = vpack.c.b16 %v252, %v252
  %v269 = vpack.c.b16 %v253, %v253
  %v270 = vpack.c.b16 %v254, %v254
  %v271 = vpack.c.b16 %v255, %v255
  %v272 = vpack.c.b16 %v256, %v256
  %289 = vst [vmem:[%s2] sm:$0xf] %v257
  %290 = vst [vmem:[%s2 + $0x4] sm:$0xf] %v258
  %291 = vst [vmem:[%s2 + $0x8] sm:$0xf] %v259
  %292 = vst [vmem:[%s2 + $0xc] sm:$0xf] %v260
  %293 = vst [vmem:[%s2 + $0x10] sm:$0xf] %v261
  %294 = vst [vmem:[%s2 + $0x14] sm:$0xf] %v262
  %295 = vst [vmem:[%s2 + $0x18] sm:$0xf] %v263
  %296 = vst [vmem:[%s2 + $0x1c] sm:$0xf] %v264
  %297 = vst [vmem:[%s2 + $0x20] sm:$0xf] %v265
  %298 = vst [vmem:[%s2 + $0x24] sm:$0xf] %v266
  %299 = vst [vmem:[%s2 + $0x28] sm:$0xf] %v267
  %300 = vst [vmem:[%s2 + $0x2c] sm:$0xf] %v268
  %301 = vst [vmem:[%s2 + $0x30] sm:$0xf] %v269
  %302 = vst [vmem:[%s2 + $0x34] sm:$0xf] %v270
  %303 = vst [vmem:[%s2 + $0x38] sm:$0xf] %v271
  %304 = vst [vmem:[%s2 + $0x3c] sm:$0xf] %v272
  %p305 = scmp.eq.s32.totalorder 0, 0
  // Predicated region
  $region10: #{spectral_transform.9} parent=0 // pred_check
    %p306 = pneg %p305
  $region11: #{spectral_transform.9} parent=0 // pred_check_branch
    %308 = sbr.rel (%p306) target = $region13
  $region12: #{spectral_transform.9} parent=0 // pred_region
    %vm309 = vcmask 7168
    %310 = vst.msk [vmem:[%s3] sm:$0xff] %vm309, 0.0
    %311 = vst.msk [vmem:[%s3 + $0x8] sm:$0xff] %vm309, 0.0
    %312 = vst.msk [vmem:[%s3 + $0x10] sm:$0xff] %vm309, 0.0
    %313 = vst.msk [vmem:[%s3 + $0x18] sm:$0xff] %vm309, 0.0
    %314 = vst.msk [vmem:[%s3 + $0x20] sm:$0xff] %vm309, 0.0
    %315 = vst.msk [vmem:[%s3 + $0x28] sm:$0xff] %vm309, 0.0
    %316 = vst.msk [vmem:[%s3 + $0x30] sm:$0xff] %vm309, 0.0
    %317 = vst.msk [vmem:[%s3 + $0x38] sm:$0xff] %vm309, 0.0
    %318 = vst.msk [vmem:[%s3 + $0x40] sm:$0xff] %vm309, 0.0
    %319 = vst.msk [vmem:[%s3 + $0x48] sm:$0xff] %vm309, 0.0
    %320 = vst.msk [vmem:[%s3 + $0x50] sm:$0xff] %vm309, 0.0
    %321 = vst.msk [vmem:[%s3 + $0x58] sm:$0xff] %vm309, 0.0
    %322 = vst.msk [vmem:[%s3 + $0x60] sm:$0xff] %vm309, 0.0
    %323 = vst.msk [vmem:[%s3 + $0x68] sm:$0xff] %vm309, 0.0
    %324 = vst.msk [vmem:[%s3 + $0x70] sm:$0xff] %vm309, 0.0
    %325 = vst.msk [vmem:[%s3 + $0x78] sm:$0xff] %vm309, 0.0
    %326 = vst.msk [vmem:[%s4] sm:$0xff] %vm309, 0.0
    %327 = vst.msk [vmem:[%s4 + $0x8] sm:$0xff] %vm309, 0.0
    %328 = vst.msk [vmem:[%s4 + $0x10] sm:$0xff] %vm309, 0.0
    %329 = vst.msk [vmem:[%s4 + $0x18] sm:$0xff] %vm309, 0.0
    %330 = vst.msk [vmem:[%s4 + $0x20] sm:$0xff] %vm309, 0.0
    %331 = vst.msk [vmem:[%s4 + $0x28] sm:$0xff] %vm309, 0.0
    %332 = vst.msk [vmem:[%s4 + $0x30] sm:$0xff] %vm309, 0.0
    %333 = vst.msk [vmem:[%s4 + $0x38] sm:$0xff] %vm309, 0.0
    %334 = vst.msk [vmem:[%s4 + $0x40] sm:$0xff] %vm309, 0.0
    %335 = vst.msk [vmem:[%s4 + $0x48] sm:$0xff] %vm309, 0.0
    %336 = vst.msk [vmem:[%s4 + $0x50] sm:$0xff] %vm309, 0.0
    %337 = vst.msk [vmem:[%s4 + $0x58] sm:$0xff] %vm309, 0.0
    %338 = vst.msk [vmem:[%s4 + $0x60] sm:$0xff] %vm309, 0.0
    %339 = vst.msk [vmem:[%s4 + $0x68] sm:$0xff] %vm309, 0.0
    %340 = vst.msk [vmem:[%s4 + $0x70] sm:$0xff] %vm309, 0.0
    %341 = vst.msk [vmem:[%s4 + $0x78] sm:$0xff] %vm309, 0.0
  $region13: #{spectral_transform.9} parent=0 // pred_fallthru
    _
  %v342 = vld [vmem:[%s3] sm:$0xff]
  %v343 = vld [vmem:[%s3 + $0x8] sm:$0xff]
  %v344 = vld [vmem:[%s3 + $0x10] sm:$0xff]
  %v345 = vld [vmem:[%s3 + $0x18] sm:$0xff]
  %v346 = vld [vmem:[%s3 + $0x20] sm:$0xff]
  %v347 = vld [vmem:[%s3 + $0x28] sm:$0xff]
  %v348 = vld [vmem:[%s3 + $0x30] sm:$0xff]
  %v349 = vld [vmem:[%s3 + $0x38] sm:$0xff]
  %v350 = vld [vmem:[%s3 + $0x40] sm:$0xff]
  %v351 = vld [vmem:[%s3 + $0x48] sm:$0xff]
  %v352 = vld [vmem:[%s3 + $0x50] sm:$0xff]
  %v353 = vld [vmem:[%s3 + $0x58] sm:$0xff]
  %v354 = vld [vmem:[%s3 + $0x60] sm:$0xff]
  %v355 = vld [vmem:[%s3 + $0x68] sm:$0xff]
  %v356 = vld [vmem:[%s3 + $0x70] sm:$0xff]
  %v357 = vld [vmem:[%s3 + $0x78] sm:$0xff]
  %358 = vadd.xlane.f32.xlu0 %v163
  %v359 = vpop.xlane.xlu0 %358
  %360 = vadd.xlane.f32.xlu0 %v166
  %v361 = vpop.xlane.xlu0 %360
  %362 = vadd.xlane.f32.xlu0 %v171
  %v363 = vpop.xlane.xlu0 %362
  %364 = vadd.xlane.f32.xlu0 %v174
  %v365 = vpop.xlane.xlu0 %364
  %366 = vadd.xlane.f32.xlu0 %v179
  %v367 = vpop.xlane.xlu0 %366
  %368 = vadd.xlane.f32.xlu0 %v182
  %v369 = vpop.xlane.xlu0 %368
  %370 = vadd.xlane.f32.xlu0 %v187
  %v371 = vpop.xlane.xlu0 %370
  %372 = vadd.xlane.f32.xlu0 %v190
  %v373 = vpop.xlane.xlu0 %372
  %374 = vadd.xlane.f32.xlu0 %v195
  %v375 = vpop.xlane.xlu0 %374
  %376 = vadd.xlane.f32.xlu0 %v198
  %v377 = vpop.xlane.xlu0 %376
  %378 = vadd.xlane.f32.xlu0 %v203
  %v379 = vpop.xlane.xlu0 %378
  %380 = vadd.xlane.f32.xlu0 %v206
  %v381 = vpop.xlane.xlu0 %380
  %382 = vadd.xlane.f32.xlu0 %v211
  %v383 = vpop.xlane.xlu0 %382
  %384 = vadd.xlane.f32.xlu0 %v214
  %v385 = vpop.xlane.xlu0 %384
  %386 = vadd.xlane.f32.xlu0 %v219
  %v387 = vpop.xlane.xlu0 %386
  %388 = vadd.xlane.f32.xlu0 %v222
  %v389 = vpop.xlane.xlu0 %388
  %v390 = vadd.f32 %v342, %v359
  %v391 = vadd.f32 %v343, %v361
  %v392 = vadd.f32 %v344, %v363
  %v393 = vadd.f32 %v345, %v365
  %v394 = vadd.f32 %v346, %v367
  %v395 = vadd.f32 %v347, %v369
  %v396 = vadd.f32 %v348, %v371
  %v397 = vadd.f32 %v349, %v373
  %v398 = vadd.f32 %v350, %v375
  %v399 = vadd.f32 %v351, %v377
  %v400 = vadd.f32 %v352, %v379
  %v401 = vadd.f32 %v353, %v381
  %v402 = vadd.f32 %v354, %v383
  %v403 = vadd.f32 %v355, %v385
  %v404 = vadd.f32 %v356, %v387
  %v405 = vadd.f32 %v357, %v389
  %vm406 = vcmask 7168
  %407 = vst.msk [vmem:[%s3] sm:$0xff] %vm406, %v390
  %408 = vst.msk [vmem:[%s3 + $0x8] sm:$0xff] %vm406, %v391
  %409 = vst.msk [vmem:[%s3 + $0x10] sm:$0xff] %vm406, %v392
  %410 = vst.msk [vmem:[%s3 + $0x18] sm:$0xff] %vm406, %v393
  %411 = vst.msk [vmem:[%s3 + $0x20] sm:$0xff] %vm406, %v394
  %412 = vst.msk [vmem:[%s3 + $0x28] sm:$0xff] %vm406, %v395
  %413 = vst.msk [vmem:[%s3 + $0x30] sm:$0xff] %vm406, %v396
  %414 = vst.msk [vmem:[%s3 + $0x38] sm:$0xff] %vm406, %v397
  %415 = vst.msk [vmem:[%s3 + $0x40] sm:$0xff] %vm406, %v398
  %416 = vst.msk [vmem:[%s3 + $0x48] sm:$0xff] %vm406, %v399
  %417 = vst.msk [vmem:[%s3 + $0x50] sm:$0xff] %vm406, %v400
  %418 = vst.msk [vmem:[%s3 + $0x58] sm:$0xff] %vm406, %v401
  %419 = vst.msk [vmem:[%s3 + $0x60] sm:$0xff] %vm406, %v402
  %420 = vst.msk [vmem:[%s3 + $0x68] sm:$0xff] %vm406, %v403
  %421 = vst.msk [vmem:[%s3 + $0x70] sm:$0xff] %vm406, %v404
  %422 = vst.msk [vmem:[%s3 + $0x78] sm:$0xff] %vm406, %v405
  %v423 = vld [vmem:[%s4] sm:$0xff]
  %v424 = vld [vmem:[%s4 + $0x8] sm:$0xff]
  %v425 = vld [vmem:[%s4 + $0x10] sm:$0xff]
  %v426 = vld [vmem:[%s4 + $0x18] sm:$0xff]
  %v427 = vld [vmem:[%s4 + $0x20] sm:$0xff]
  %v428 = vld [vmem:[%s4 + $0x28] sm:$0xff]
  %v429 = vld [vmem:[%s4 + $0x30] sm:$0xff]
  %v430 = vld [vmem:[%s4 + $0x38] sm:$0xff]
  %v431 = vld [vmem:[%s4 + $0x40] sm:$0xff]
  %v432 = vld [vmem:[%s4 + $0x48] sm:$0xff]
  %v433 = vld [vmem:[%s4 + $0x50] sm:$0xff]
  %v434 = vld [vmem:[%s4 + $0x58] sm:$0xff]
  %v435 = vld [vmem:[%s4 + $0x60] sm:$0xff]
  %v436 = vld [vmem:[%s4 + $0x68] sm:$0xff]
  %v437 = vld [vmem:[%s4 + $0x70] sm:$0xff]
  %v438 = vld [vmem:[%s4 + $0x78] sm:$0xff]
  %v439 = vmul.f32 %v163, %v163
  %v440 = vmul.f32 %v166, %v166
  %v441 = vmul.f32 %v171, %v171
  %v442 = vmul.f32 %v174, %v174
  %v443 = vmul.f32 %v179, %v179
  %v444 = vmul.f32 %v182, %v182
  %v445 = vmul.f32 %v187, %v187
  %v446 = vmul.f32 %v190, %v190
  %v447 = vmul.f32 %v195, %v195
  %v448 = vmul.f32 %v198, %v198
  %v449 = vmul.f32 %v203, %v203
  %v450 = vmul.f32 %v206, %v206
  %v451 = vmul.f32 %v211, %v211
  %v452 = vmul.f32 %v214, %v214
  %v453 = vmul.f32 %v219, %v219
  %v454 = vmul.f32 %v222, %v222
  %455 = vadd.xlane.f32.xlu0 %v439
  %v456 = vpop.xlane.xlu0 %455
  %457 = vadd.xlane.f32.xlu0 %v440
  %v458 = vpop.xlane.xlu0 %457
  %459 = vadd.xlane.f32.xlu0 %v441
  %v460 = vpop.xlane.xlu0 %459
  %461 = vadd.xlane.f32.xlu0 %v442
  %v462 = vpop.xlane.xlu0 %461
  %463 = vadd.xlane.f32.xlu0 %v443
  %v464 = vpop.xlane.xlu0 %463
  %465 = vadd.xlane.f32.xlu0 %v444
  %v466 = vpop.xlane.xlu0 %465
  %467 = vadd.xlane.f32.xlu0 %v445
  %v468 = vpop.xlane.xlu0 %467
  %469 = vadd.xlane.f32.xlu0 %v446
  %v470 = vpop.xlane.xlu0 %469
  %471 = vadd.xlane.f32.xlu0 %v447
  %v472 = vpop.xlane.xlu0 %471
  %473 = vadd.xlane.f32.xlu0 %v448
  %v474 = vpop.xlane.xlu0 %473
  %475 = vadd.xlane.f32.xlu0 %v449
  %v476 = vpop.xlane.xlu0 %475
  %477 = vadd.xlane.f32.xlu0 %v450
  %v478 = vpop.xlane.xlu0 %477
  %479 = vadd.xlane.f32.xlu0 %v451
  %v480 = vpop.xlane.xlu0 %479
  %481 = vadd.xlane.f32.xlu0 %v452
  %v482 = vpop.xlane.xlu0 %481
  %483 = vadd.xlane.f32.xlu0 %v453
  %v484 = vpop.xlane.xlu0 %483
  %485 = vadd.xlane.f32.xlu0 %v454
  %v486 = vpop.xlane.xlu0 %485
  %v487 = vadd.f32 %v423, %v456
  %v488 = vadd.f32 %v424, %v458
  %v489 = vadd.f32 %v425, %v460
  %v490 = vadd.f32 %v426, %v462
  %v491 = vadd.f32 %v427, %v464
  %v492 = vadd.f32 %v428, %v466
  %v493 = vadd.f32 %v429, %v468
  %v494 = vadd.f32 %v430, %v470
  %v495 = vadd.f32 %v431, %v472
  %v496 = vadd.f32 %v432, %v474
  %v497 = vadd.f32 %v433, %v476
  %v498 = vadd.f32 %v434, %v478
  %v499 = vadd.f32 %v435, %v480
  %v500 = vadd.f32 %v436, %v482
  %v501 = vadd.f32 %v437, %v484
  %v502 = vadd.f32 %v438, %v486
  %503 = vst.msk [vmem:[%s4] sm:$0xff] %vm406, %v487
  %504 = vst.msk [vmem:[%s4 + $0x8] sm:$0xff] %vm406, %v488
  %505 = vst.msk [vmem:[%s4 + $0x10] sm:$0xff] %vm406, %v489
  %506 = vst.msk [vmem:[%s4 + $0x18] sm:$0xff] %vm406, %v490
  %507 = vst.msk [vmem:[%s4 + $0x20] sm:$0xff] %vm406, %v491
  %508 = vst.msk [vmem:[%s4 + $0x28] sm:$0xff] %vm406, %v492
  %509 = vst.msk [vmem:[%s4 + $0x30] sm:$0xff] %vm406, %v493
  %510 = vst.msk [vmem:[%s4 + $0x38] sm:$0xff] %vm406, %v494
  %511 = vst.msk [vmem:[%s4 + $0x40] sm:$0xff] %vm406, %v495
  %512 = vst.msk [vmem:[%s4 + $0x48] sm:$0xff] %vm406, %v496
  %513 = vst.msk [vmem:[%s4 + $0x50] sm:$0xff] %vm406, %v497
  %514 = vst.msk [vmem:[%s4 + $0x58] sm:$0xff] %vm406, %v498
  %515 = vst.msk [vmem:[%s4 + $0x60] sm:$0xff] %vm406, %v499
  %516 = vst.msk [vmem:[%s4 + $0x68] sm:$0xff] %vm406, %v500
  %517 = vst.msk [vmem:[%s4 + $0x70] sm:$0xff] %vm406, %v501
  %518 = vst.msk [vmem:[%s4 + $0x78] sm:$0xff] %vm406, %v502
  // Predicated region
  $region14: #{spectral_transform.9} parent=0 // pred_check
    _
  $region15: #{spectral_transform.9} parent=0 // pred_check_branch
    %520 = sbr.rel (0) target = $region17
  $region16: #{spectral_transform.9} parent=0 // pred_region
    _
  $region17: #{spectral_transform.9} parent=0 // pred_fallthru
    _
  // Predicated region
  $region18: #{spectral_transform.9} parent=0 // pred_check
    _
  $region19: #{spectral_transform.9} parent=0 // pred_check_branch
    %522 = sbr.rel (0) target = $region21
  $region20: #{spectral_transform.9} parent=0 // pred_region
    _
  $region21: #{spectral_transform.9} parent=0 // pred_fallthru
    _
  // Predicated region
  $region22: #{spectral_transform.9} parent=0 // pred_check
    _
  $region23: #{spectral_transform.9} parent=0 // pred_check_branch
    %524 = sbr.rel (0) target = $region25
  $region24: #{spectral_transform.9} parent=0 // pred_region
    _
  $region25: #{spectral_transform.9} parent=0 // pred_fallthru
    _
  // Predicated region
  $region26: #{spectral_transform.9} parent=0 // pred_check
    _
  $region27: #{spectral_transform.9} parent=0 // pred_check_branch
    %526 = sbr.rel (0) target = $region29
  $region28: #{spectral_transform.9} parent=0 // pred_region
    _
  $region29: #{spectral_transform.9} parent=0 // pred_fallthru
    _
  // Predicated region
  $region30: #{spectral_transform.9} parent=0 // pred_check
    _
  $region31: #{spectral_transform.9} parent=0 // pred_check_branch
    %528 = sbr.rel (0) target = $region33
  $region32: #{spectral_transform.9} parent=0 // pred_region
    _
  $region33: #{spectral_transform.9} parent=0 // pred_fallthru
    _
  // Predicated region
  $region34: #{spectral_transform.9} parent=0 // pred_check
    _
  $region35: #{spectral_transform.9} parent=0 // pred_check_branch
    %530 = sbr.rel (0) target = $region37
  $region36: #{spectral_transform.9} parent=0 // pred_region
    _
  $region37: #{spectral_transform.9} parent=0 // pred_fallthru
    _

// kernel: spectral_transform.10
$region0: #{spectral_transform.10}
  #allocation0 [shape = 'u32[]', space=smem, size = 0x4, offset = 0x4, fixed_abs, tag = 'smem constant byte address 0x4 - core index']
  #allocation1 [shape = 'u32[144,128]{1,0:T(1,128)}', space=vmem, size = 0x12000, scoped, tag = 'internal scratch']
  %s0 = inlined_call_operand.vmem [shape: bf16[64,128], index: 0, kind: input, shape index: {}]
  %s1 = inlined_call_operand.vmem [shape: bf16[128,128], index: 1, kind: input, shape index: {}]
  %s2 = inlined_call_operand.vmem [shape: f32[128,1], index: 2, kind: input, shape index: {}]
  %s3 = inlined_call_operand.vmem [shape: f32[128,1], index: 3, kind: input, shape index: {}]
  %s4 = inlined_call_operand.vmem [shape: bf16[64,128], index: 4, kind: output, shape index: {}]
  %s5 = sld [smem:[#allocation0]]
  $region26: #{spectral_transform.10} parent=0
    _
  %s7 = ssub.s32 1, %s5
  %s8 = scalar_select 0, %s7, %s5
  // Predicated region
  $region2: #{spectral_transform.10} parent=0 // pred_check
    _
  $region3: #{spectral_transform.10} parent=0 // pred_check_branch
    %10 = sbr.rel (0) target = $region5
  $region4: #{spectral_transform.10} parent=0 // pred_region
    _
  $region5: #{spectral_transform.10} parent=0 // pred_fallthru
    _
  // Predicated region
  $region6: #{spectral_transform.10} parent=0 // pred_check
    _
  $region7: #{spectral_transform.10} parent=0 // pred_check_branch
    %12 = sbr.rel (0) target = $region9
  $region8: #{spectral_transform.10} parent=0 // pred_region
    _
  $region9: #{spectral_transform.10} parent=0 // pred_fallthru
    _
  // Predicated region
  $region10: #{spectral_transform.10} parent=0 // pred_check
    _
  $region11: #{spectral_transform.10} parent=0 // pred_check_branch
    %14 = sbr.rel (0) target = $region13
  $region12: #{spectral_transform.10} parent=0 // pred_region
    _
  $region13: #{spectral_transform.10} parent=0 // pred_fallthru
    _
  // Predicated region
  $region14: #{spectral_transform.10} parent=0 // pred_check
    _
  $region15: #{spectral_transform.10} parent=0 // pred_check_branch
    %16 = sbr.rel (0) target = $region17
  $region16: #{spectral_transform.10} parent=0 // pred_region
    _
  $region17: #{spectral_transform.10} parent=0 // pred_fallthru
    _
  %v18 = vld [vmem:[%s1] sm:$0xf]
  %v19 = vld [vmem:[%s1 + $0x4] sm:$0xf]
  %v20 = vld [vmem:[%s1 + $0x8] sm:$0xf]
  %v21 = vld [vmem:[%s1 + $0xc] sm:$0xf]
  %v22 = vld [vmem:[%s1 + $0x10] sm:$0xf]
  %v23 = vld [vmem:[%s1 + $0x14] sm:$0xf]
  %v24 = vld [vmem:[%s1 + $0x18] sm:$0xf]
  %v25 = vld [vmem:[%s1 + $0x1c] sm:$0xf]
  %v26 = vld [vmem:[%s1 + $0x20] sm:$0xf]
  %v27 = vld [vmem:[%s1 + $0x24] sm:$0xf]
  %v28 = vld [vmem:[%s1 + $0x28] sm:$0xf]
  %v29 = vld [vmem:[%s1 + $0x2c] sm:$0xf]
  %v30 = vld [vmem:[%s1 + $0x30] sm:$0xf]
  %v31 = vld [vmem:[%s1 + $0x34] sm:$0xf]
  %v32 = vld [vmem:[%s1 + $0x38] sm:$0xf]
  %v33 = vld [vmem:[%s1 + $0x3c] sm:$0xf]
  %v34 = vunpack.c.l.bf16 %v18
  %v35 = vunpack.c.l.bf16 %v19
  %v36 = vunpack.c.l.bf16 %v20
  %v37 = vunpack.c.l.bf16 %v21
  %v38 = vunpack.c.l.bf16 %v22
  %v39 = vunpack.c.l.bf16 %v23
  %v40 = vunpack.c.l.bf16 %v24
  %v41 = vunpack.c.l.bf16 %v25
  %v42 = vunpack.c.l.bf16 %v26
  %v43 = vunpack.c.l.bf16 %v27
  %v44 = vunpack.c.l.bf16 %v28
  %v45 = vunpack.c.l.bf16 %v29
  %v46 = vunpack.c.l.bf16 %v30
  %v47 = vunpack.c.l.bf16 %v31
  %v48 = vunpack.c.l.bf16 %v32
  %v49 = vunpack.c.l.bf16 %v33
  %v50 = vld [vmem:[%s2] sm:$0xff]
  %v51 = vld [vmem:[%s2 + $0x8] sm:$0xff]
  %v52 = vld [vmem:[%s2 + $0x10] sm:$0xff]
  %v53 = vld [vmem:[%s2 + $0x18] sm:$0xff]
  %v54 = vld [vmem:[%s2 + $0x20] sm:$0xff]
  %v55 = vld [vmem:[%s2 + $0x28] sm:$0xff]
  %v56 = vld [vmem:[%s2 + $0x30] sm:$0xff]
  %v57 = vld [vmem:[%s2 + $0x38] sm:$0xff]
  %v58 = vld [vmem:[%s2 + $0x40] sm:$0xff]
  %v59 = vld [vmem:[%s2 + $0x48] sm:$0xff]
  %v60 = vld [vmem:[%s2 + $0x50] sm:$0xff]
  %v61 = vld [vmem:[%s2 + $0x58] sm:$0xff]
  %v62 = vld [vmem:[%s2 + $0x60] sm:$0xff]
  %v63 = vld [vmem:[%s2 + $0x68] sm:$0xff]
  %v64 = vld [vmem:[%s2 + $0x70] sm:$0xff]
  %v65 = vld [vmem:[%s2 + $0x78] sm:$0xff]
  %67 = vset.pattern.permute.xlu0 0
  %68 = vperm.xlu0 %67, %v50
  %v69 = vpop.permute.xlu0 %68
  %72 = vset.pattern.permute.xlu0 0
  %73 = vperm.xlu0 %72, %v51
  %v74 = vpop.permute.xlu0 %73
  %77 = vset.pattern.permute.xlu0 0
  %78 = vperm.xlu0 %77, %v52
  %v79 = vpop.permute.xlu0 %78
  %82 = vset.pattern.permute.xlu0 0
  %83 = vperm.xlu0 %82, %v53
  %v84 = vpop.permute.xlu0 %83
  %87 = vset.pattern.permute.xlu0 0
  %88 = vperm.xlu0 %87, %v54
  %v89 = vpop.permute.xlu0 %88
  %92 = vset.pattern.permute.xlu0 0
  %93 = vperm.xlu0 %92, %v55
  %v94 = vpop.permute.xlu0 %93
  %97 = vset.pattern.permute.xlu0 0
  %98 = vperm.xlu0 %97, %v56
  %v99 = vpop.permute.xlu0 %98
  %102 = vset.pattern.permute.xlu0 0
  %103 = vperm.xlu0 %102, %v57
  %v104 = vpop.permute.xlu0 %103
  %107 = vset.pattern.permute.xlu0 0
  %108 = vperm.xlu0 %107, %v58
  %v109 = vpop.permute.xlu0 %108
  %112 = vset.pattern.permute.xlu0 0
  %113 = vperm.xlu0 %112, %v59
  %v114 = vpop.permute.xlu0 %113
  %117 = vset.pattern.permute.xlu0 0
  %118 = vperm.xlu0 %117, %v60
  %v119 = vpop.permute.xlu0 %118
  %122 = vset.pattern.permute.xlu0 0
  %123 = vperm.xlu0 %122, %v61
  %v124 = vpop.permute.xlu0 %123
  %127 = vset.pattern.permute.xlu0 0
  %128 = vperm.xlu0 %127, %v62
  %v129 = vpop.permute.xlu0 %128
  %132 = vset.pattern.permute.xlu0 0
  %133 = vperm.xlu0 %132, %v63
  %v134 = vpop.permute.xlu0 %133
  %137 = vset.pattern.permute.xlu0 0
  %138 = vperm.xlu0 %137, %v64
  %v139 = vpop.permute.xlu0 %138
  %142 = vset.pattern.permute.xlu0 0
  %143 = vperm.xlu0 %142, %v65
  %v144 = vpop.permute.xlu0 %143
  %v146 = vmul.f32 %v34, %v69
  %v147 = vmul.f32 %v35, %v74
  %v148 = vmul.f32 %v36, %v79
  %v149 = vmul.f32 %v37, %v84
  %v150 = vmul.f32 %v38, %v89
  %v151 = vmul.f32 %v39, %v94
  %v152 = vmul.f32 %v40, %v99
  %v153 = vmul.f32 %v41, %v104
  %v154 = vmul.f32 %v42, %v109
  %v155 = vmul.f32 %v43, %v114
  %v156 = vmul.f32 %v44, %v119
  %v157 = vmul.f32 %v45, %v124
  %v158 = vmul.f32 %v46, %v129
  %v159 = vmul.f32 %v47, %v134
  %v160 = vmul.f32 %v48, %v139
  %v161 = vmul.f32 %v49, %v144
  %v162 = vld [vmem:[%s3] sm:$0xff]
  %v163 = vld [vmem:[%s3 + $0x8] sm:$0xff]
  %v164 = vld [vmem:[%s3 + $0x10] sm:$0xff]
  %v165 = vld [vmem:[%s3 + $0x18] sm:$0xff]
  %v166 = vld [vmem:[%s3 + $0x20] sm:$0xff]
  %v167 = vld [vmem:[%s3 + $0x28] sm:$0xff]
  %v168 = vld [vmem:[%s3 + $0x30] sm:$0xff]
  %v169 = vld [vmem:[%s3 + $0x38] sm:$0xff]
  %v170 = vld [vmem:[%s3 + $0x40] sm:$0xff]
  %v171 = vld [vmem:[%s3 + $0x48] sm:$0xff]
  %v172 = vld [vmem:[%s3 + $0x50] sm:$0xff]
  %v173 = vld [vmem:[%s3 + $0x58] sm:$0xff]
  %v174 = vld [vmem:[%s3 + $0x60] sm:$0xff]
  %v175 = vld [vmem:[%s3 + $0x68] sm:$0xff]
  %v176 = vld [vmem:[%s3 + $0x70] sm:$0xff]
  %v177 = vld [vmem:[%s3 + $0x78] sm:$0xff]
  %179 = vset.pattern.permute.xlu0 0
  %180 = vperm.xlu0 %179, %v162
  %v181 = vpop.permute.xlu0 %180
  %184 = vset.pattern.permute.xlu0 0
  %185 = vperm.xlu0 %184, %v163
  %v186 = vpop.permute.xlu0 %185
  %189 = vset.pattern.permute.xlu0 0
  %190 = vperm.xlu0 %189, %v164
  %v191 = vpop.permute.xlu0 %190
  %194 = vset.pattern.permute.xlu0 0
  %195 = vperm.xlu0 %194, %v165
  %v196 = vpop.permute.xlu0 %195
  %199 = vset.pattern.permute.xlu0 0
  %200 = vperm.xlu0 %199, %v166
  %v201 = vpop.permute.xlu0 %200
  %204 = vset.pattern.permute.xlu0 0
  %205 = vperm.xlu0 %204, %v167
  %v206 = vpop.permute.xlu0 %205
  %209 = vset.pattern.permute.xlu0 0
  %210 = vperm.xlu0 %209, %v168
  %v211 = vpop.permute.xlu0 %210
  %214 = vset.pattern.permute.xlu0 0
  %215 = vperm.xlu0 %214, %v169
  %v216 = vpop.permute.xlu0 %215
  %219 = vset.pattern.permute.xlu0 0
  %220 = vperm.xlu0 %219, %v170
  %v221 = vpop.permute.xlu0 %220
  %224 = vset.pattern.permute.xlu0 0
  %225 = vperm.xlu0 %224, %v171
  %v226 = vpop.permute.xlu0 %225
  %229 = vset.pattern.permute.xlu0 0
  %230 = vperm.xlu0 %229, %v172
  %v231 = vpop.permute.xlu0 %230
  %234 = vset.pattern.permute.xlu0 0
  %235 = vperm.xlu0 %234, %v173
  %v236 = vpop.permute.xlu0 %235
  %239 = vset.pattern.permute.xlu0 0
  %240 = vperm.xlu0 %239, %v174
  %v241 = vpop.permute.xlu0 %240
  %244 = vset.pattern.permute.xlu0 0
  %245 = vperm.xlu0 %244, %v175
  %v246 = vpop.permute.xlu0 %245
  %249 = vset.pattern.permute.xlu0 0
  %250 = vperm.xlu0 %249, %v176
  %v251 = vpop.permute.xlu0 %250
  %254 = vset.pattern.permute.xlu0 0
  %255 = vperm.xlu0 %254, %v177
  %v256 = vpop.permute.xlu0 %255
  %v258 = vadd.f32 %v146, %v181
  %v259 = vadd.f32 %v147, %v186
  %v260 = vadd.f32 %v148, %v191
  %v261 = vadd.f32 %v149, %v196
  %v262 = vadd.f32 %v150, %v201
  %v263 = vadd.f32 %v151, %v206
  %v264 = vadd.f32 %v152, %v211
  %v265 = vadd.f32 %v153, %v216
  %v266 = vadd.f32 %v154, %v221
  %v267 = vadd.f32 %v155, %v226
  %v268 = vadd.f32 %v156, %v231
  %v269 = vadd.f32 %v157, %v236
  %v270 = vadd.f32 %v158, %v241
  %v271 = vadd.f32 %v159, %v246
  %v272 = vadd.f32 %v160, %v251
  %v273 = vadd.f32 %v161, %v256
  %v274 = vmax.f32 %v258, 0.0
  %v275 = vmax.f32 %v259, 0.0
  %v276 = vmax.f32 %v260, 0.0
  %v277 = vmax.f32 %v261, 0.0
  %v278 = vmax.f32 %v262, 0.0
  %v279 = vmax.f32 %v263, 0.0
  %v280 = vmax.f32 %v264, 0.0
  %v281 = vmax.f32 %v265, 0.0
  %v282 = vmax.f32 %v266, 0.0
  %v283 = vmax.f32 %v267, 0.0
  %v284 = vmax.f32 %v268, 0.0
  %v285 = vmax.f32 %v269, 0.0
  %v286 = vmax.f32 %v270, 0.0
  %v287 = vmax.f32 %v271, 0.0
  %v288 = vmax.f32 %v272, 0.0
  %v289 = vmax.f32 %v273, 0.0
  %v290 = vpack.c.bf16 %v275, %v274
  %v291 = vpack.c.bf16 %v277, %v276
  %v292 = vpack.c.bf16 %v279, %v278
  %v293 = vpack.c.bf16 %v281, %v280
  %v294 = vpack.c.bf16 %v283, %v282
  %v295 = vpack.c.bf16 %v285, %v284
  %v296 = vpack.c.bf16 %v287, %v286
  %v297 = vpack.c.bf16 %v289, %v288
  %v298 = vld [vmem:[%s0] sm:$0xf]
  %v299 = vld [vmem:[%s0 + $0x4] sm:$0xf]
  %v300 = vld [vmem:[%s0 + $0x8] sm:$0xf]
  %v301 = vld [vmem:[%s0 + $0xc] sm:$0xf]
  %v302 = vld [vmem:[%s0 + $0x10] sm:$0xf]
  %v303 = vld [vmem:[%s0 + $0x14] sm:$0xf]
  %v304 = vld [vmem:[%s0 + $0x18] sm:$0xf]
  %v305 = vld [vmem:[%s0 + $0x1c] sm:$0xf]
  %v314 = vunpack.c.l.b16 %v298
  %v315 = vunpack.c.l.b16 %v299
  %v316 = vunpack.c.l.b16 %v300
  %v317 = vunpack.c.l.b16 %v301
  %v318 = vunpack.c.l.b16 %v302
  %v319 = vunpack.c.l.b16 %v303
  %v320 = vunpack.c.l.b16 %v304
  %v321 = vunpack.c.l.b16 %v305
  %v322 = vpack.c.b16 %v315, %v314
  %v323 = vpack.c.b16 %v317, %v316
  %v324 = vpack.c.b16 %v319, %v318
  %v325 = vpack.c.b16 %v321, %v320
  %330 = vmatprep.subr.bf16.mxu0 0
  %331 = vmatpush1.bf16.msra.mxu0 %v297
  %332 = vmatprep.subr.bf16.mxu0 0
  %333 = vmatpush1.bf16.msra.mxu0 %v296
  %334 = vmatprep.subr.bf16.mxu0 0
  %335 = vmatpush1.bf16.msra.mxu0 %v295
  %336 = vmatprep.subr.bf16.mxu0 0
  %337 = vmatpush1.bf16.msra.mxu0 %v294
  %338 = vmatprep.subr.bf16.mxu0 0
  %339 = vmatpush1.bf16.msra.mxu0 %v293
  %340 = vmatprep.subr.bf16.mxu0 0
  %341 = vmatpush1.bf16.msra.mxu0 %v292
  %342 = vmatprep.subr.bf16.mxu0 0
  %343 = vmatpush1.bf16.msra.mxu0 %v291
  %344 = vmatprep.subr.bf16.mxu0 0
  %345 = vmatpush1.bf16.msra.mxu0 %v290
  %346 = vmatprep.subr.bf16.mxu0 0
  %347 = vmatpush2.bf16.msra.mxu0 0
  %348 = vmatprep.subr.bf16.mxu0 0
  %349 = vmatpush2.bf16.msra.mxu0 0
  %350 = vmatprep.subr.bf16.mxu0 0
  %351 = vmatpush2.bf16.msra.mxu0 0
  %352 = vmatprep.subr.bf16.mxu0 0
  %353 = vmatpush2.bf16.msra.mxu0 0
  %354 = vmatprep.subr.bf16.mxu0 0
  %355 = vmatpush2.bf16.msra.mxu0 0
  %356 = vmatprep.subr.bf16.mxu0 0
  %357 = vmatpush2.bf16.msra.mxu0 0
  %358 = vmatprep.subr.bf16.mxu0 0
  %359 = vmatpush2.bf16.msra.mxu0 0
  %360 = vmatprep.subr.bf16.mxu0 0
  %361 = vmatpush2.bf16.msra.mxu0 0
  %362 = vmatprep.mubr.bf16.mxu0 0
  %363 = vmatmul.mubr.bf16.gmra.mxu0 %v322
  %v364 = vpop.f32.mrf.mxu0
  %v365 = vadd.f32 0.0, %v364
  %v366 = vpop.f32.mrf.mxu0
  %v367 = vpop.f32.mrf.mxu0
  %v368 = vadd.f32 0.0, %v367
  %v369 = vpop.f32.mrf.mxu0
  %370 = vmatprep.mubr.bf16.mxu0 0
  %371 = vmatmul.mubr.bf16.gmra.mxu0 %v323
  %v372 = vpop.f32.mrf.mxu0
  %v373 = vadd.f32 0.0, %v372
  %v374 = vpop.f32.mrf.mxu0
  %v375 = vpop.f32.mrf.mxu0
  %v376 = vadd.f32 0.0, %v375
  %v377 = vpop.f32.mrf.mxu0
  %378 = vmatprep.mubr.bf16.mxu0 0
  %379 = vmatmul.mubr.bf16.gmra.mxu0 %v324
  %v380 = vpop.f32.mrf.mxu0
  %v381 = vadd.f32 0.0, %v380
  %v382 = vpop.f32.mrf.mxu0
  %v383 = vpop.f32.mrf.mxu0
  %v384 = vadd.f32 0.0, %v383
  %v385 = vpop.f32.mrf.mxu0
  %386 = vmatprep.mubr.bf16.mxu0 0
  %387 = vmatmul.mubr.bf16.gmra.mxu0 %v325
  %v388 = vpop.f32.mrf.mxu0
  %v389 = vadd.f32 0.0, %v388
  %v390 = vpop.f32.mrf.mxu0
  %v391 = vpop.f32.mrf.mxu0
  %v392 = vadd.f32 0.0, %v391
  %v393 = vpop.f32.mrf.mxu0
  %394 = vdwg.mxu0
  %v395 = vpack.c.bf16 %v368, %v365
  %v396 = vpack.c.bf16 %v376, %v373
  %v397 = vpack.c.bf16 %v384, %v381
  %v398 = vpack.c.bf16 %v392, %v389
  %v403 = vunpack.c.l.b16 %v395
  %v404 = vunpack.c.h.b16 %v395
  %v405 = vunpack.c.l.b16 %v396
  %v406 = vunpack.c.h.b16 %v396
  %v407 = vunpack.c.l.b16 %v397
  %v408 = vunpack.c.h.b16 %v397
  %v409 = vunpack.c.l.b16 %v398
  %v410 = vunpack.c.h.b16 %v398
  %v411 = vpack.c.b16 %v403, %v403
  %v412 = vpack.c.b16 %v404, %v404
  %v413 = vpack.c.b16 %v405, %v405
  %v414 = vpack.c.b16 %v406, %v406
  %v415 = vpack.c.b16 %v407, %v407
  %v416 = vpack.c.b16 %v408, %v408
  %v417 = vpack.c.b16 %v409, %v409
  %v418 = vpack.c.b16 %v410, %v410
  %427 = vst [vmem:[%s4] sm:$0xf] %v411
  %428 = vst [vmem:[%s4 + $0x4] sm:$0xf] %v412
  %429 = vst [vmem:[%s4 + $0x8] sm:$0xf] %v413
  %430 = vst [vmem:[%s4 + $0xc] sm:$0xf] %v414
  %431 = vst [vmem:[%s4 + $0x10] sm:$0xf] %v415
  %432 = vst [vmem:[%s4 + $0x14] sm:$0xf] %v416
  %433 = vst [vmem:[%s4 + $0x18] sm:$0xf] %v417
  %434 = vst [vmem:[%s4 + $0x1c] sm:$0xf] %v418
  // Predicated region
  $region18: #{spectral_transform.10} parent=0 // pred_check
    _
  $region19: #{spectral_transform.10} parent=0 // pred_check_branch
    %436 = sbr.rel (0) target = $region21
  $region20: #{spectral_transform.10} parent=0 // pred_region
    _
  $region21: #{spectral_transform.10} parent=0 // pred_fallthru
    _
  // Predicated region
  $region22: #{spectral_transform.10} parent=0 // pred_check
    _
  $region23: #{spectral_transform.10} parent=0 // pred_check_branch
    %438 = sbr.rel (0) target = $region25
  $region24: #{spectral_transform.10} parent=0 // pred_region
    _
  $region25: #{spectral_transform.10} parent=0 // pred_fallthru
    _

// kernel: spectral_transform.13
$region0: #{spectral_transform.13}
  #allocation0 [shape = 'u32[]', space=smem, size = 0x4, offset = 0x4, fixed_abs, tag = 'smem constant byte address 0x4 - core index']
  #allocation1 [shape = 'u32[144,128]{1,0:T(1,128)}', space=vmem, size = 0x12000, scoped, tag = 'internal scratch']
  %s0 = inlined_call_operand.vmem [shape: bf16[8,4], index: 0, kind: input, shape index: {}]
  %s1 = inlined_call_operand.vmem [shape: bf16[4,512], index: 1, kind: input, shape index: {}]
  %s2 = inlined_call_operand.vmem [shape: bf16[4,512], index: 2, kind: input, shape index: {}]
  %s3 = inlined_call_operand.vmem [shape: bf16[4,512], index: 3, kind: input, shape index: {}]
  %s4 = inlined_call_operand.vmem [shape: bf16[8,512], index: 4, kind: output, shape index: {}]
  %s5 = sld [smem:[#allocation0]]
  $region26: #{spectral_transform.13} parent=0
    _
  %s7 = ssub.s32 1, %s5
  %s8 = scalar_select 0, %s7, %s5
  // Predicated region
  $region2: #{spectral_transform.13} parent=0 // pred_check
    _
  $region3: #{spectral_transform.13} parent=0 // pred_check_branch
    %10 = sbr.rel (0) target = $region5
  $region4: #{spectral_transform.13} parent=0 // pred_region
    _
  $region5: #{spectral_transform.13} parent=0 // pred_fallthru
    _
  // Predicated region
  $region6: #{spectral_transform.13} parent=0 // pred_check
    _
  $region7: #{spectral_transform.13} parent=0 // pred_check_branch
    %12 = sbr.rel (0) target = $region9
  $region8: #{spectral_transform.13} parent=0 // pred_region
    _
  $region9: #{spectral_transform.13} parent=0 // pred_fallthru
    _
  // Predicated region
  $region10: #{spectral_transform.13} parent=0 // pred_check
    _
  $region11: #{spectral_transform.13} parent=0 // pred_check_branch
    %14 = sbr.rel (0) target = $region13
  $region12: #{spectral_transform.13} parent=0 // pred_region
    _
  $region13: #{spectral_transform.13} parent=0 // pred_fallthru
    _
  // Predicated region
  $region14: #{spectral_transform.13} parent=0 // pred_check
    _
  $region15: #{spectral_transform.13} parent=0 // pred_check_branch
    %16 = sbr.rel (0) target = $region17
  $region16: #{spectral_transform.13} parent=0 // pred_region
    _
  $region17: #{spectral_transform.13} parent=0 // pred_fallthru
    _
  %v18 = vld [vmem:[%s1] sm:$0xff]
  %v19 = vld [vmem:[%s2] sm:$0xff]
  %v20 = vadd.bf16 %v18, %v19
  %v21 = vld [vmem:[%s3] sm:$0xff]
  %v22 = vadd.bf16 %v20, %v21
  %v23 = vld [vmem:[%s0] sm:$0xf]
  %v25 = vcombine.high %v22, %v22
  %v27 = vunpack.c.l.s4 1983009808
  %v28 = vunpack.c.0.s8 %v27
  %v29 = vlaneseq
  %v30 = vshrl.u32 %v29, 7
  %v31 = vsub.s32 %v28, %v30
  %v32 = vrot.slane %v22, %v31
  %v34 = vunpack.c.l.s4 1983009808
  %v35 = vunpack.c.0.s8 %v34
  %v36 = vlaneseq
  %v37 = vshrl.u32 %v36, 7
  %v38 = vsub.s32 %v35, %v37
  %v39 = vrot.slane %v25, %v38
  %v40 = vcombine.high %v32, %v32
  %v41 = vcombine.high %v39, %v39
  %vm42 = vcmask 31744
  %v44 = vsel %vm42, %v23, 0
  %vm46 = vcmask 1041408
  %v48 = vsel %vm46, %v32, 0
  %v51 = vsel %vm46, %v40, 0
  %v54 = vsel %vm46, %v39, 0
  %v57 = vsel %vm46, %v41, 0
  %59 = vmatprep.subr.bf16.mxu0 0
  %60 = vmatpush1.bf16.msra.mxu0 0
  %61 = vmatprep.subr.bf16.mxu0 0
  %62 = vmatpush1.bf16.msra.mxu0 0
  %63 = vmatprep.subr.bf16.mxu0 0
  %64 = vmatpush1.bf16.msra.mxu0 0
  %65 = vmatprep.subr.bf16.mxu0 0
  %66 = vmatpush1.bf16.msra.mxu0 0
  %67 = vmatprep.subr.bf16.mxu0 0
  %68 = vmatpush1.bf16.msra.mxu0 0
  %69 = vmatprep.subr.bf16.mxu0 0
  %70 = vmatpush1.bf16.msra.mxu0 0
  %71 = vmatprep.subr.bf16.mxu0 0
  %72 = vmatpush1.bf16.msra.mxu0 0
  %73 = vmatprep.subr.bf16.mxu0 %v51
  %74 = vmatpush1.bf16.msra.mxu0 %v48
  %75 = vmatprep.subr.bf16.mxu0 0
  %76 = vmatpush2.bf16.msra.mxu0 0
  %77 = vmatprep.subr.bf16.mxu0 0
  %78 = vmatpush2.bf16.msra.mxu0 0
  %79 = vmatprep.subr.bf16.mxu0 0
  %80 = vmatpush2.bf16.msra.mxu0 0
  %81 = vmatprep.subr.bf16.mxu0 0
  %82 = vmatpush2.bf16.msra.mxu0 0
  %83 = vmatprep.subr.bf16.mxu0 0
  %84 = vmatpush2.bf16.msra.mxu0 0
  %85 = vmatprep.subr.bf16.mxu0 0
  %86 = vmatpush2.bf16.msra.mxu0 0
  %87 = vmatprep.subr.bf16.mxu0 0
  %88 = vmatpush2.bf16.msra.mxu0 0
  %89 = vmatprep.subr.bf16.mxu0 0
  %90 = vmatpush2.bf16.msra.mxu0 0
  %91 = vmatprep.mubr.bf16.mxu0 0
  %92 = vmatmul.mubr.bf16.gmra.mxu0 %v44
  %v93 = vpop.f32.mrf.mxu0
  %v94 = vadd.f32 0.0, %v93
  %v95 = vpop.f32.mrf.mxu0
  %v96 = vadd.f32 0.0, %v95
  %v97 = vpop.f32.mrf.mxu0
  %v98 = vpop.f32.mrf.mxu0
  %99 = vdwg.mxu0
  %100 = vmatprep.subr.bf16.mxu0 0
  %101 = vmatpush1.bf16.msra.mxu0 0
  %102 = vmatprep.subr.bf16.mxu0 0
  %103 = vmatpush1.bf16.msra.mxu0 0
  %104 = vmatprep.subr.bf16.mxu0 0
  %105 = vmatpush1.bf16.msra.mxu0 0
  %106 = vmatprep.subr.bf16.mxu0 0
  %107 = vmatpush1.bf16.msra.mxu0 0
  %108 = vmatprep.subr.bf16.mxu0 0
  %109 = vmatpush1.bf16.msra.mxu0 0
  %110 = vmatprep.subr.bf16.mxu0 0
  %111 = vmatpush1.bf16.msra.mxu0 0
  %112 = vmatprep.subr.bf16.mxu0 0
  %113 = vmatpush1.bf16.msra.mxu0 0
  %114 = vmatprep.subr.bf16.mxu0 %v57
  %115 = vmatpush1.bf16.msra.mxu0 %v54
  %116 = vmatprep.subr.bf16.mxu0 0
  %117 = vmatpush2.bf16.msra.mxu0 0
  %118 = vmatprep.subr.bf16.mxu0 0
  %119 = vmatpush2.bf16.msra.mxu0 0
  %120 = vmatprep.subr.bf16.mxu0 0
  %121 = vmatpush2.bf16.msra.mxu0 0
  %122 = vmatprep.subr.bf16.mxu0 0
  %123 = vmatpush2.bf16.msra.mxu0 0
  %124 = vmatprep.subr.bf16.mxu0 0
  %125 = vmatpush2.bf16.msra.mxu0 0
  %126 = vmatprep.subr.bf16.mxu0 0
  %127 = vmatpush2.bf16.msra.mxu0 0
  %128 = vmatprep.subr.bf16.mxu0 0
  %129 = vmatpush2.bf16.msra.mxu0 0
  %130 = vmatprep.subr.bf16.mxu0 0
  %131 = vmatpush2.bf16.msra.mxu0 0
  %132 = vmatprep.mubr.bf16.mxu0 0
  %133 = vmatmul.mubr.bf16.gmra.mxu0 %v44
  %v134 = vpop.f32.mrf.mxu0
  %v135 = vadd.f32 0.0, %v134
  %v136 = vpop.f32.mrf.mxu0
  %v137 = vadd.f32 0.0, %v136
  %v138 = vpop.f32.mrf.mxu0
  %v139 = vpop.f32.mrf.mxu0
  %140 = vdwg.mxu0
  %v141 = vpack.c.bf16 %v94, %v94
  %v142 = vpack.c.bf16 %v96, %v96
  %v143 = vpack.c.bf16 %v135, %v135
  %v144 = vpack.c.bf16 %v137, %v137
  %v149 = vunpack.c.l.b16 %v141
  %v150 = vunpack.c.l.b16 %v142
  %v151 = vunpack.c.l.b16 %v143
  %v152 = vunpack.c.l.b16 %v144
  %v153 = vpack.c.b16 %v150, %v149
  %v154 = vpack.c.b16 %v152, %v151
  %157 = vst [vmem:[%s4] sm:$0xff] %v153
  %158 = vst [vmem:[%s4 + $0x8] sm:$0xff] %v154
  // Predicated region
  $region18: #{spectral_transform.13} parent=0 // pred_check
    _
  $region19: #{spectral_transform.13} parent=0 // pred_check_branch
    %160 = sbr.rel (0) target = $region21
  $region20: #{spectral_transform.13} parent=0 // pred_region
    _
  $region21: #{spectral_transform.13} parent=0 // pred_fallthru
    _
  // Predicated region
  $region22: #{spectral_transform.13} parent=0 // pred_check
    _
  $region23: #{spectral_transform.13} parent=0 // pred_check_branch
    %162 = sbr.rel (0) target = $region25
  $region24: #{spectral_transform.13} parent=0 // pred_region
    _
  $region25: #{spectral_transform.13} parent=0 // pred_fallthru
    _

</llo_original>
